<compile_context>
chip_gen: v5e
topology: v5e:2x2
jax: 0.10.0
libtpu: 0.0.40
codegen_flags: <defaults>
</compile_context>

<pallas_src>
import functools
import math

import jax
import jax.numpy as jnp
import numpy as np
from jax import lax
from jax.experimental import pallas as pl
from jax.experimental.pallas import tpu as pltpu


_MXU_DTYPE = jnp.bfloat16      # MXU operand dtype (f32 accumulation everywhere)
_LN_EPS = 1e-5


# ----------------------------- hardware-aware sizing -----------------------------

@functools.lru_cache(maxsize=None)
def _vmem_capacity_bytes():
    try:
        return int(pltpu.get_tpu_info().vmem_capacity_bytes)
    except Exception:
        return 64 * 1024 * 1024        # conservative (v7x-sized) default


def _vmem_limit_bytes():
    # ~75% of physical VMEM: ~48 MiB on v7x, ~96 MiB on v5e/v6e.
    return min(int(_vmem_capacity_bytes() * 3 // 4), 112 * 1024 * 1024)


def _cparams(dims):
    return pltpu.CompilerParams(dimension_semantics=dims,
                                vmem_limit_bytes=_vmem_limit_bytes())


def _row_tile(n):
    """Largest row tile dividing n, sized to the chip's VMEM generation."""
    target = 1024 if _vmem_capacity_bytes() >= 96 * 1024 * 1024 else 512
    if n <= target:
        return n
    for rt in (1024, 512, 256, 128, 64, 32, 16, 8):
        if rt <= target and n % rt == 0:
            return rt
    return n


def _seq_tile(T):
    """Query/key tile for attention; divides T, <= 128."""
    if T <= 128:
        return T
    for t in (128, 64, 32, 16, 8):
        if T % t == 0:
            return t
    return T


# ----------------------------- diagonal shear (roll probe + fallback) -----------

@functools.lru_cache(maxsize=None)
def _resolve_shear_mode(t):
    """Pick the pltpu.roll (shift, stride) realising bias[i,j] = dwin[i, j-i+t].

    Runs a tiny probe kernel on the device and checks the result against the
    exact permutation (as the perf review recommends).  If the strided roll is
    unavailable or the sign convention does not match, fall back to an
    in-kernel one-hot shear (always correct, slower).
    NOTE: must be warmed OUTSIDE jit (done in __main__); under tracing the
    probe cannot run and the fallback is cached instead.
    """
    x = (np.arange(t, dtype=np.float32)[:, None] * 1024.0
         + np.arange(2 * t, dtype=np.float32)[None, :])
    want = np.empty((t, t), np.float32)
    for i in range(t):
        for j in range(t):
            want[i, j] = x[i, (j - i + t) % (2 * t)]
    for shift, stride in ((t, 1), (t, -1)):
        try:
            def kern(x_ref, o_ref, *, _s=shift, _st=stride):
                o_ref[...] = pltpu.roll(x_ref[...], _s, axis=1,
                                        stride=_st, stride_axis=0)
            got = pl.pallas_call(
                kern,
                out_shape=jax.ShapeDtypeStruct((t, 2 * t), jnp.float32),
            )(jnp.asarray(x))
            got = np.asarray(jax.block_until_ready(got))
            if np.array_equal(got[:, :t], want):
                return ("roll", shift, stride)
        except Exception:
            continue
    return ("onehot",)


def _shear(dwin, t, mode):
    """bias[i, j] = dwin[i, j - i + t]   for i, j in [0, t)."""
    if mode[0] == "roll":
        _, shift, stride = mode
        rolled = pltpu.roll(dwin, shift, axis=1, stride=stride, stride_axis=0)
        return rolled[:, :t]
    # Fallback: one-hot select + reduce (VPU).  Correct on every chip, slower.
    w_idx = (lax.broadcasted_iota(jnp.int32, (t, t), 1)
             - lax.broadcasted_iota(jnp.int32, (t, t), 0) + t)
    sel = lax.broadcasted_iota(jnp.int32, (t, t, 2 * t), 2) == w_idx[:, :, None]
    return jnp.sum(jnp.where(sel, dwin[:, None, :], 0.0), axis=-1)


# ----------------------------- fused LN1 + QKV projection -----------------------

def _ln_qkv_kernel(x_ref, g_ref, b_ref, w_ref, bias_ref, qkv_ref):
    x = x_ref[...].astype(jnp.float32)
    mu = jnp.mean(x, axis=-1, keepdims=True)
    var = jnp.mean((x - mu) ** 2, axis=-1, keepdims=True)
    h = (x - mu) * lax.rsqrt(var + _LN_EPS) * g_ref[...] + b_ref[...]
    y = jnp.dot(h.astype(_MXU_DTYPE), w_ref[...],
                preferred_element_type=jnp.float32) + bias_ref[...]
    qkv_ref[...] = y.astype(qkv_ref.dtype)


def ln_qkv(x2d, g, b, w_qkv, b_qkv):
    """x2d: (N, C) f32; w_qkv: (C, 3C) bf16.  Returns one (N, 3C) bf16 array."""
    n, c = x2d.shape
    c3 = w_qkv.shape[1]
    rt = _row_tile(n)
    # TODO(synk): single-buffer the constant weight blocks (pipeline_mode=
    # pl.Buffered(1)) to halve resident-weight VMEM on v7x.
    return pl.pallas_call(
        _ln_qkv_kernel,
        grid=(n // rt,),
        in_specs=[pl.BlockSpec((rt, c), lambda i: (i, 0)),
                  pl.BlockSpec((1, c), lambda i: (0, 0)),
                  pl.BlockSpec((1, c), lambda i: (0, 0)),
                  pl.BlockSpec((c, c3), lambda i: (0, 0)),
                  pl.BlockSpec((1, c3), lambda i: (0, 0))],
        out_specs=pl.BlockSpec((rt, c3), lambda i: (i, 0)),
        out_shape=jax.ShapeDtypeStruct((n, c3), _MXU_DTYPE),
        compiler_params=_cparams(("parallel",)),
    )(x2d, g.reshape(1, c), b.reshape(1, c), w_qkv, b_qkv.reshape(1, c3))


# ----------------------------- plain linear (pos projection) --------------------

def _linear_kernel(x_ref, w_ref, b_ref, o_ref):
    y = jnp.dot(x_ref[...].astype(_MXU_DTYPE), w_ref[...],
                preferred_element_type=jnp.float32) + b_ref[...]
    o_ref[...] = y.astype(o_ref.dtype)


def linear_rows(x2d, w, b):
    n, cin = x2d.shape
    cout = w.shape[1]
    rt = _row_tile(n)
    return pl.pallas_call(
        _linear_kernel,
        grid=(n // rt,),
        in_specs=[pl.BlockSpec((rt, cin), lambda i: (i, 0)),
                  pl.BlockSpec((cin, cout), lambda i: (0, 0)),
                  pl.BlockSpec((1, cout), lambda i: (0, 0))],
        out_specs=pl.BlockSpec((rt, cout), lambda i: (i, 0)),
        out_shape=jax.ShapeDtypeStruct((n, cout), jnp.float32),
        compiler_params=_cparams(("parallel",)),
    )(x2d, w, b.reshape(1, cout))


# ------------------ fused out-proj + residual + LN2 + MLP + residual ------------

def _outproj_ln_mlp_kernel(ctx_ref, x_ref, wo_ref, bo_ref, g_ref, bt_ref,
                           w1_ref, b1_ref, w2_ref, b2_ref, o_ref):
    attn = jnp.dot(ctx_ref[...].astype(_MXU_DTYPE), wo_ref[...],
                   preferred_element_type=jnp.float32) + bo_ref[...]
    x1 = x_ref[...].astype(jnp.float32) + attn
    mu = jnp.mean(x1, axis=-1, keepdims=True)
    var = jnp.mean((x1 - mu) ** 2, axis=-1, keepdims=True)
    h = (x1 - mu) * lax.rsqrt(var + _LN_EPS) * g_ref[...] + bt_ref[...]
    h1 = jnp.maximum(jnp.dot(h.astype(_MXU_DTYPE), w1_ref[...],
                             preferred_element_type=jnp.float32) + b1_ref[...],
                     0.0)
    y = jnp.dot(h1.astype(_MXU_DTYPE), w2_ref[...],
                preferred_element_type=jnp.float32) + b2_ref[...]
    o_ref[...] = (x1 + y).astype(o_ref.dtype)


def outproj_ln_mlp(ctx2d, x2d, wo, bo, g, b, w1, b1, w2, b2):
    n, c = x2d.shape
    hd = w1.shape[1]
    rt = _row_tile(n)
    row = pl.BlockSpec((rt, c), lambda i: (i, 0))
    const = lambda shape: pl.BlockSpec(shape, lambda i: (0, 0))
    # TODO(synk): optionally fold W_o into the attention epilogue so ctx never
    # touches HBM at all.
    return pl.pallas_call(
        _outproj_ln_mlp_kernel,
        grid=(n // rt,),
        in_specs=[row, row,
                  const((c, c)), const((1, c)),
                  const((1, c)), const((1, c)),
                  const((c, hd)), const((1, hd)),
                  const((hd, c)), const((1, c))],
        out_specs=row,
        out_shape=jax.ShapeDtypeStruct((n, c), jnp.float32),
        compiler_params=_cparams(("parallel",)),
    )(ctx2d, x2d, wo, bo.reshape(1, c), g.reshape(1, c), b.reshape(1, c),
      w1, b1.reshape(1, hd), w2, b2.reshape(1, c))


# ----------------------------- disentangled attention ---------------------------

def _make_attn_kernel(t, dk, shear_mode):
    f32 = jnp.float32
    dn = (((1,), (1,)), ((), ()))          # contract last dims, no batch dims

    def kernel(q_ref, kq_ref, k_ref, v_ref, pkl_ref, pkh_ref, pql_ref, pqh_ref,
               o_ref, m_ref, l_ref, acc_ref):
        ki = pl.program_id(3)

        @pl.when(ki == 0)
        def _init():
            m_ref[...] = jnp.full((t, 1), -jnp.inf, f32)
            l_ref[...] = jnp.zeros((t, 1), f32)
            acc_ref[...] = jnp.zeros((t, dk), f32)

        q = q_ref[0, 0]           # (t, dk) bf16, softmax scale folded in
        kq = kq_ref[0, 0]         # keys at the *query* rows (p2c term)
        k = k_ref[0, 0]           # keys at the key rows
        v = v_ref[0, 0]

        # One MXU push for content scores + c2p window (shared LHS = q).
        rhs = jnp.concatenate([k, pkl_ref[0, 0], pkh_ref[0, 0]], axis=0)  # (3t, dk)
        s_all = lax.dot_general(q, rhs, dn, preferred_element_type=f32)   # (t, 3t)
        pq_win = jnp.concatenate([pql_ref[0, 0], pqh_ref[0, 0]], axis=0)  # (2t, dk)
        d_p2c = lax.dot_general(kq, pq_win, dn, preferred_element_type=f32)  # (t, 2t)

        # dwin[i, w] is the positional bias at relative offset
        # d = (ki - qi - 1) * t + w; the diagonal shear bias[i, j] =
        # dwin[i, j - i + t] runs on the XLU (roll) or a VPU one-hot fallback.
        dwin = s_all[:, t:] + d_p2c                        # (t, 2t) f32
        s = s_all[:, :t] + _shear(dwin, t, shear_mode)     # (t, t)  f32

        # online softmax across key tiles
        m_prev = m_ref[...]
        m_new = jnp.maximum(m_prev, jnp.max(s, axis=-1, keepdims=True))
        alpha = jnp.exp(m_prev - m_new)
        p = jnp.exp(s - m_new)
        l_ref[...] = alpha * l_ref[...] + jnp.sum(p, axis=-1, keepdims=True)
        acc_ref[...] = alpha * acc_ref[...] + jnp.dot(
            p.astype(v.dtype), v, preferred_element_type=f32)
        m_ref[...] = m_new

        @pl.when(ki == pl.num_programs(3) - 1)
        def _finalize():
            o_ref[0, 0] = (acc_ref[...] / l_ref[...]).astype(o_ref.dtype)

    return kernel


def disentangled_attention(q, k, v, pk_heads, pq_heads, *, t, shear_mode):
    """q/k/v: (B, H, T, dk) bf16 (scale folded into q);
    pk_heads/pq_heads: (H, 2*nq, t, dk) bf16 position tables indexed by
    relative offset (pq pre-scaled).  Returns ctx (B, H, T, dk) bf16."""
    B, H, T, dk = q.shape
    nq = T // t
    kern = _make_attn_kernel(t, dk, shear_mode)

    blk = (1, 1, t, dk)
    in_specs = [
        pl.BlockSpec(blk, lambda b, h, qi, ki: (b, h, qi, 0)),                # q
        pl.BlockSpec(blk, lambda b, h, qi, ki: (b, h, qi, 0)),                # k @ query rows
        pl.BlockSpec(blk, lambda b, h, qi, ki: (b, h, ki, 0)),                # k @ key rows
        pl.BlockSpec(blk, lambda b, h, qi, ki: (b, h, ki, 0)),                # v
        pl.BlockSpec(blk, lambda b, h, qi, ki: (h, ki - qi + nq - 1, 0, 0)),  # pk lo
        pl.BlockSpec(blk, lambda b, h, qi, ki: (h, ki - qi + nq, 0, 0)),      # pk hi
        pl.BlockSpec(blk, lambda b, h, qi, ki: (h, ki - qi + nq - 1, 0, 0)),  # pq lo
        pl.BlockSpec(blk, lambda b, h, qi, ki: (h, ki - qi + nq, 0, 0)),      # pq hi
    ]
    out_spec = pl.BlockSpec(blk, lambda b, h, qi, ki: (b, h, qi, 0))

    flops = int(B * H * nq * nq * 2 * t * dk * (3 * t + 2 * t + t))
    transcendentals = int(B * H * nq * nq * (t * t + t))
    bytes_accessed = int(B * H * nq * nq * 8 * t * dk * 2 + B * H * T * dk * 2)

    return pl.pallas_call(
        kern,
        grid=(B, H, nq, nq),
        in_specs=in_specs,
        out_specs=out_spec,
        out_shape=jax.ShapeDtypeStruct((B, H, T, dk), _MXU_DTYPE),
        scratch_shapes=[pltpu.VMEM((t, 1), jnp.float32),
                        pltpu.VMEM((t, 1), jnp.float32),
                        pltpu.VMEM((t, dk), jnp.float32)],
        compiler_params=_cparams(("parallel", "parallel", "parallel",
                                  "arbitrary")),
        cost_estimate=pl.CostEstimate(flops=flops,
                                      transcendentals=transcendentals,
                                      bytes_accessed=bytes_accessed),
    )(q, k, k, v, pk_heads, pk_heads, pq_heads, pq_heads)


# ----------------------------- block wrapper ------------------------------------

def _rel_index(d, M):
    """Module's relative-position index: the +M clip/offset is applied twice
    (build_relative_position followed by disentangled_attention_bias)."""
    return np.clip(np.clip(d + M, 0, 2 * M - 1) + M, 0, 2 * M - 1)


def disentangled_transformer_block(x, p, *, num_heads, max_pos, shear_mode=None):
    B, T, C = x.shape
    H = num_heads
    dk = C // H
    M = max_pos
    scale = 1.0 / math.sqrt(dk * 3)       # scale_factor = 3 (content + c2p + p2c)
    t = _seq_tile(T)
    nq = T // t
    if shear_mode is None:
        shear_mode = _resolve_shear_mode(t)     # warmed eagerly in __main__

    x2d = x.reshape(B * T, C)

    # ---- fused LN1 + concatenated QKV (softmax scale folded into Q columns) ----
    w_qkv = jnp.concatenate([p["wq"] * scale, p["wk"], p["wv"]],
                            axis=1).astype(_MXU_DTYPE)
    b_qkv = jnp.concatenate([p["bq"] * scale, p["bk"], p["bv"]], axis=0)
    qkv = ln_qkv(x2d, p["ln1_g"], p["ln1_b"], w_qkv, b_qkv)          # (N, 3C) bf16
    qkv = qkv.reshape(B, T, 3, H, dk).transpose(2, 0, 3, 1, 4)       # (3,B,H,T,dk)
    q, k, v = qkv[0], qkv[1], qkv[2]

    # ---- positional projections (share_att_key=False) as one fused linear ----
    w_pos = jnp.concatenate([p["w_pos_k"], p["w_pos_q"]], axis=1).astype(_MXU_DTYPE)
    b_pos = jnp.concatenate([p["b_pos_k"], p["b_pos_q"]], axis=0)
    pos = linear_rows(p["rel_emb"], w_pos, b_pos)                    # (2M, 2C) f32
    pos_k_tab, pos_q_tab = pos[:, :C], pos[:, C:]

    # re-index by relative offset d = j - i (table row e = d + T), split by head
    idx = jnp.asarray(_rel_index(np.arange(-T, T), M), dtype=jnp.int32)

    def _to_heads(tab):
        return (tab.reshape(2 * T, H, dk).transpose(1, 0, 2)
                   .reshape(H, 2 * nq, t, dk).astype(_MXU_DTYPE))

    pk_heads = _to_heads(jnp.take(pos_k_tab, idx, axis=0))
    pq_heads = _to_heads(jnp.take(pos_q_tab, idx, axis=0) * scale)

    ctx = disentangled_attention(q, k, v, pk_heads, pq_heads,
                                 t=t, shear_mode=shear_mode)         # (B,H,T,dk)
    ctx2d = ctx.transpose(0, 2, 1, 3).reshape(B * T, C)

    # ---- fused out-proj + residual + LN2 + MLP + residual ----
    out2d = outproj_ln_mlp(ctx2d, x2d,
                           p["wo"].astype(_MXU_DTYPE), p["bo"],
                           p["ln2_g"], p["ln2_b"],
                           p["w1"].astype(_MXU_DTYPE), p["b1"],
                           p["w2"].astype(_MXU_DTYPE), p["b2"])
    return out2d.reshape(B, T, C)


# ----------------------------- pure-JAX reference -------------------------------

def build_rel_pos(T, max_pos):
    ctx = jnp.arange(T)[:, None]
    mem = jnp.arange(T)[None, :]
    rp = jnp.clip(mem - ctx + max_pos, 0, 2 * max_pos - 1)
    return jnp.clip(rp + max_pos, 0, 2 * max_pos - 1).astype(jnp.int32)


def reference_block(x, p, *, num_heads, max_pos):
    B, T, C = x.shape
    H = num_heads
    dk = C // H
    M = max_pos
    scale = 1.0 / math.sqrt(dk * 3)

    def ln(v, g, b):
        mu = v.mean(-1, keepdims=True)
        var = ((v - mu) ** 2).mean(-1, keepdims=True)
        return (v - mu) / jnp.sqrt(var + 1e-5) * g + b

    h = ln(x, p["ln1_g"], p["ln1_b"])
    q = (h @ p["wq"] + p["bq"]).reshape(B, T, H, dk).transpose(0, 2, 1, 3)
    k = (h @ p["wk"] + p["bk"]).reshape(B, T, H, dk).transpose(0, 2, 1, 3)
    v = (h @ p["wv"] + p["bv"]).reshape(B, T, H, dk).transpose(0, 2, 1, 3)

    pos_k = (p["rel_emb"] @ p["w_pos_k"] + p["b_pos_k"]).reshape(2 * M, H, dk)
    pos_k = pos_k.transpose(1, 0, 2)
    pos_q = (p["rel_emb"] @ p["w_pos_q"] + p["b_pos_q"]).reshape(2 * M, H, dk)
    pos_q = pos_q.transpose(1, 0, 2)

    rel_pos = build_rel_pos(T, M)
    idx = jnp.broadcast_to(rel_pos[None, None], (B, H, T, T))

    scores = jnp.einsum("bhid,bhjd->bhij", q, k) * scale
    c2p_full = jnp.einsum("bhid,hpd->bhip", q, pos_k) * scale
    c2p = jnp.take_along_axis(c2p_full, idx, axis=-1)
    p2c_full = jnp.einsum("bhid,hpd->bhip", k, pos_q) * scale
    p2c = jnp.take_along_axis(p2c_full, idx, axis=-1)

    s = scores + c2p + p2c
    probs = jax.nn.softmax(s, axis=-1)
    ctx = jnp.einsum("bhij,bhjd->bhid", probs, v)
    ctx = ctx.transpose(0, 2, 1, 3).reshape(B, T, C)
    x1 = x + ctx @ p["wo"] + p["bo"]

    h2 = ln(x1, p["ln2_g"], p["ln2_b"])
    y = jnp.maximum(h2 @ p["w1"] + p["b1"], 0.0) @ p["w2"] + p["b2"]
    return x1 + y


# ----------------------------- main ----------------------------------------------

if __name__ == "__main__":
    B, T = 2, 8
    d_model, num_heads, hidden_dim = 32, 4, 64
    max_pos = 16                      # max_position_embeddings (pos_ebd_size)

    key = jax.random.PRNGKey(0)
    ks = jax.random.split(key, 16)

    def w(k_, shape):
        return (0.02 * jax.random.normal(k_, shape)).astype(jnp.float32)

    params = {
        "ln1_g": jnp.ones((d_model,), jnp.float32),
        "ln1_b": jnp.zeros((d_model,), jnp.float32),
        "wq": w(ks[0], (d_model, d_model)), "bq": w(ks[1], (d_model,)),
        "wk": w(ks[2], (d_model, d_model)), "bk": w(ks[3], (d_model,)),
        "wv": w(ks[4], (d_model, d_model)), "bv": w(ks[5], (d_model,)),
        "wo": w(ks[6], (d_model, d_model)), "bo": w(ks[7], (d_model,)),
        "rel_emb": w(ks[8], (2 * max_pos, d_model)),
        "w_pos_k": w(ks[9], (d_model, d_model)), "b_pos_k": w(ks[10], (d_model,)),
        "w_pos_q": w(ks[11], (d_model, d_model)), "b_pos_q": w(ks[12], (d_model,)),
        "ln2_g": jnp.ones((d_model,), jnp.float32),
        "ln2_b": jnp.zeros((d_model,), jnp.float32),
        "w1": w(ks[13], (d_model, hidden_dim)),
        "b1": jnp.zeros((hidden_dim,), jnp.float32),
        "w2": w(ks[14], (hidden_dim, d_model)),
        "b2": jnp.zeros((d_model,), jnp.float32),
    }

    x = jax.random.normal(ks[15], (B, T, d_model), dtype=jnp.float32)

    # Resolve the roll shift/stride convention on-device, OUTSIDE jit.
    shear_mode = _resolve_shear_mode(_seq_tile(T))

    fwd = functools.partial(disentangled_transformer_block,
                            num_heads=num_heads, max_pos=max_pos,
                            shear_mode=shear_mode)
    out = jax.jit(fwd)(x, params)
    out = jax.block_until_ready(out)

    ref = jax.block_until_ready(
        reference_block(x, params, num_heads=num_heads, max_pos=max_pos))
    np.testing.assert_allclose(np.asarray(out), np.asarray(ref),
                               rtol=2e-2, atol=2e-2)

    print("KERNEL_OK")
</pallas_src>

<mosaic_0001>
module attributes {stable_mosaic.version = 11 : i64} {
  func.func @kern(%arg0: memref<8x16xf32, #tpu.memory_space<vmem>>, %arg1: memref<8x16xf32, #tpu.memory_space<vmem>>) attributes {dimension_semantics = [], scalar_prefetch = 0 : i64, scratch_operands = 0 : i64, tpu.core_type = #tpu.core_type<tc>} {
    %c0 = arith.constant 0 : index
    %c0_0 = arith.constant 0 : index
    %0 = vector.load %arg0[%c0, %c0_0] : memref<8x16xf32, #tpu.memory_space<vmem>>, vector<8x16xf32>
    %c8_i32 = arith.constant 8 : i32
    %1 = tpu.dynamic_rotate %0 by %c8_i32 dim 1 {stride = 1 : si32, stride_dimension = 0 : si32} : vector<8x16xf32>, i32 -> vector<8x16xf32>
    %c0_1 = arith.constant 0 : index
    %c0_2 = arith.constant 0 : index
    %2 = vector.load %arg1[%c0_1, %c0_2] : memref<8x16xf32, #tpu.memory_space<vmem>>, vector<8x16xf32>
    tpu.vector_store %arg1[%c0_1, %c0_2], %1 {strides = array<i32>} : memref<8x16xf32, #tpu.memory_space<vmem>>, vector<8x16xf32>,
    return
  }
}

module attributes {stable_mosaic.version = 11 : i64} {
  func.func @_linear_kernel(%arg0: i32, %arg1: memref<32x32xf32, #tpu.memory_space<vmem>>, %arg2: memref<32x64xbf16, #tpu.memory_space<vmem>>, %arg3: memref<1x64xf32, #tpu.memory_space<vmem>>, %arg4: memref<32x64xf32, #tpu.memory_space<vmem>>) attributes {dimension_semantics = [#tpu.dimension_semantics<parallel>], iteration_bounds = array<i64: 1>, scalar_prefetch = 0 : i64, scratch_operands = 0 : i64, tpu.core_type = #tpu.core_type<tc>, window_params = [{transform_indices = @transform_0, window_bounds = array<i64: 32, 32>}, {pipeline_mode = #tpu.pipeline_mode<synchronous>, transform_indices = @transform_1, window_bounds = array<i64: 32, 64>}, {pipeline_mode = #tpu.pipeline_mode<synchronous>, transform_indices = @transform_2, window_bounds = array<i64: 1, 64>}, {transform_indices = @transform_3, window_bounds = array<i64: 32, 64>}]} {
    %c0 = arith.constant 0 : index
    %c0_0 = arith.constant 0 : index
    %0 = vector.load %arg1[%c0, %c0_0] : memref<32x32xf32, #tpu.memory_space<vmem>>, vector<32x32xf32>
    %1 = arith.truncf %0 : vector<32x32xf32> to vector<32x32xbf16>
    %c0_1 = arith.constant 0 : index
    %c0_2 = arith.constant 0 : index
    %2 = vector.load %arg2[%c0_1, %c0_2] : memref<32x64xbf16, #tpu.memory_space<vmem>>, vector<32x64xbf16>
    %cst = arith.constant dense<0.000000e+00> : vector<32x64xf32>
    %3 = tpu.matmul %1, %2, %cst {dimension_numbers = #tpu.dot_dimension_numbers<[1], [0], [0], [1], [0, 0, 1, 1], [], []>} : vector<32x32xbf16>, vector<32x64xbf16>, vector<32x64xf32> -> vector<32x64xf32>
    %c0_3 = arith.constant 0 : index
    %c0_4 = arith.constant 0 : index
    %4 = vector.load %arg3[%c0_3, %c0_4] : memref<1x64xf32, #tpu.memory_space<vmem>>, vector<1x64xf32>
    %5 = vector.broadcast %4 : vector<1x64xf32> to vector<32x64xf32>
    %6 = arith.addf %3, %5 : vector<32x64xf32>
    %c0_5 = arith.constant 0 : index
    %c0_6 = arith.constant 0 : index
    %7 = vector.load %arg4[%c0_5, %c0_6] : memref<32x64xf32, #tpu.memory_space<vmem>>, vector<32x64xf32>
    tpu.vector_store %arg4[%c0_5, %c0_6], %6 {strides = array<i32>} : memref<32x64xf32, #tpu.memory_space<vmem>>, vector<32x64xf32>,
    return
  }
  func.func @transform_0(%arg0: i32) -> (i32, i32) {
    %c0_i32 = arith.constant 0 : i32
    %c0_i32_0 = arith.constant 0 : i32
    return %arg0, %c0_i32 : i32, i32
  }
  func.func @transform_1(%arg0: i32) -> (i32, i32) {
    %c0_i32 = arith.constant 0 : i32
    %c0_i32_0 = arith.constant 0 : i32
    %c0_i32_1 = arith.constant 0 : i32
    return %c0_i32, %c0_i32_0 : i32, i32
  }
  func.func @transform_2(%arg0: i32) -> (i32, i32) {
    %c0_i32 = arith.constant 0 : i32
    %c0_i32_0 = arith.constant 0 : i32
    %c0_i32_1 = arith.constant 0 : i32
    return %c0_i32, %c0_i32_0 : i32, i32
  }
  func.func @transform_3(%arg0: i32) -> (i32, i32) {
    %c0_i32 = arith.constant 0 : i32
    %c0_i32_0 = arith.constant 0 : i32
    return %arg0, %c0_i32 : i32, i32
  }
}

module attributes {stable_mosaic.version = 11 : i64} {
  func.func @_ln_qkv_kernel(%arg0: i32, %arg1: memref<16x32xf32, #tpu.memory_space<vmem>>, %arg2: memref<1x32xf32, #tpu.memory_space<vmem>>, %arg3: memref<1x32xf32, #tpu.memory_space<vmem>>, %arg4: memref<32x96xbf16, #tpu.memory_space<vmem>>, %arg5: memref<1x96xf32, #tpu.memory_space<vmem>>, %arg6: memref<16x96xbf16, #tpu.memory_space<vmem>>) attributes {dimension_semantics = [#tpu.dimension_semantics<parallel>], iteration_bounds = array<i64: 1>, scalar_prefetch = 0 : i64, scratch_operands = 0 : i64, tpu.core_type = #tpu.core_type<tc>, window_params = [{transform_indices = @transform_0, window_bounds = array<i64: 16, 32>}, {pipeline_mode = #tpu.pipeline_mode<synchronous>, transform_indices = @transform_1, window_bounds = array<i64: 1, 32>}, {pipeline_mode = #tpu.pipeline_mode<synchronous>, transform_indices = @transform_2, window_bounds = array<i64: 1, 32>}, {pipeline_mode = #tpu.pipeline_mode<synchronous>, transform_indices = @transform_3, window_bounds = array<i64: 32, 96>}, {pipeline_mode = #tpu.pipeline_mode<synchronous>, transform_indices = @transform_4, window_bounds = array<i64: 1, 96>}, {transform_indices = @transform_5, window_bounds = array<i64: 16, 96>}]} {
    %c0 = arith.constant 0 : index
    %c0_0 = arith.constant 0 : index
    %0 = vector.load %arg1[%c0, %c0_0] : memref<16x32xf32, #tpu.memory_space<vmem>>, vector<16x32xf32>
    %cst = arith.constant dense<0.000000e+00> : vector<16xf32>
    %1 = vector.multi_reduction <add>, %0, %cst [1] : vector<16x32xf32> to vector<16xf32>
    %2 = vector.shape_cast %1 : vector<16xf32> to vector<16x1xf32>
    %cst_1 = arith.constant 3.200000e+01 : f32
    %3 = vector.broadcast %cst_1 : f32 to vector<16x1xf32>
    %4 = arith.divf %2, %3 : vector<16x1xf32>
    %5 = vector.broadcast %4 : vector<16x1xf32> to vector<16x32xf32>
    %6 = arith.subf %0, %5 : vector<16x32xf32>
    %7 = arith.mulf %6, %6 : vector<16x32xf32>
    %cst_2 = arith.constant dense<0.000000e+00> : vector<16xf32>
    %8 = vector.multi_reduction <add>, %7, %cst_2 [1] : vector<16x32xf32> to vector<16xf32>
    %9 = vector.shape_cast %8 : vector<16xf32> to vector<16x1xf32>
    %cst_3 = arith.constant 3.200000e+01 : f32
    %10 = vector.broadcast %cst_3 : f32 to vector<16x1xf32>
    %11 = arith.divf %9, %10 : vector<16x1xf32>
    %12 = vector.broadcast %4 : vector<16x1xf32> to vector<16x32xf32>
    %13 = arith.subf %0, %12 : vector<16x32xf32>
    %cst_4 = arith.constant 9.99999974E-6 : f32
    %14 = vector.broadcast %cst_4 : f32 to vector<16x1xf32>
    %15 = arith.addf %11, %14 : vector<16x1xf32>
    %16 = math.rsqrt %15 : vector<16x1xf32>
    %17 = vector.broadcast %16 : vector<16x1xf32> to vector<16x32xf32>
    %18 = arith.mulf %13, %17 : vector<16x32xf32>
    %c0_5 = arith.constant 0 : index
    %c0_6 = arith.constant 0 : index
    %19 = vector.load %arg2[%c0_5, %c0_6] : memref<1x32xf32, #tpu.memory_space<vmem>>, vector<1x32xf32>
    %20 = vector.broadcast %19 : vector<1x32xf32> to vector<16x32xf32>
    %21 = arith.mulf %18, %20 : vector<16x32xf32>
    %c0_7 = arith.constant 0 : index
    %c0_8 = arith.constant 0 : index
    %22 = vector.load %arg3[%c0_7, %c0_8] : memref<1x32xf32, #tpu.memory_space<vmem>>, vector<1x32xf32>
    %23 = vector.broadcast %22 : vector<1x32xf32> to vector<16x32xf32>
    %24 = arith.addf %21, %23 : vector<16x32xf32>
    %25 = arith.truncf %24 : vector<16x32xf32> to vector<16x32xbf16>
    %c0_9 = arith.constant 0 : index
    %c0_10 = arith.constant 0 : index
    %26 = vector.load %arg4[%c0_9, %c0_10] : memref<32x96xbf16, #tpu.memory_space<vmem>>, vector<32x96xbf16>
    %cst_11 = arith.constant dense<0.000000e+00> : vector<16x96xf32>
    %27 = tpu.matmul %25, %26, %cst_11 {dimension_numbers = #tpu.dot_dimension_numbers<[1], [0], [0], [1], [0, 0, 1, 1], [], []>} : vector<16x32xbf16>, vector<32x96xbf16>, vector<16x96xf32> -> vector<16x96xf32>
    %c0_12 = arith.constant 0 : index
    %c0_13 = arith.constant 0 : index
    %28 = vector.load %arg5[%c0_12, %c0_13] : memref<1x96xf32, #tpu.memory_space<vmem>>, vector<1x96xf32>
    %29 = vector.broadcast %28 : vector<1x96xf32> to vector<16x96xf32>
    %30 = arith.addf %27, %29 : vector<16x96xf32>
    %31 = arith.truncf %30 : vector<16x96xf32> to vector<16x96xbf16>
    %c0_14 = arith.constant 0 : index
    %c0_15 = arith.constant 0 : index
    %32 = vector.load %arg6[%c0_14, %c0_15] : memref<16x96xbf16, #tpu.memory_space<vmem>>, vector<16x96xbf16>
    tpu.vector_store %arg6[%c0_14, %c0_15], %31 {strides = array<i32>} : memref<16x96xbf16, #tpu.memory_space<vmem>>, vector<16x96xbf16>,
    return
  }
  func.func @transform_0(%arg0: i32) -> (i32, i32) {
    %c0_i32 = arith.constant 0 : i32
    %c0_i32_0 = arith.constant 0 : i32
    return %arg0, %c0_i32 : i32, i32
  }
  func.func @transform_1(%arg0: i32) -> (i32, i32) {
    %c0_i32 = arith.constant 0 : i32
    %c0_i32_0 = arith.constant 0 : i32
    %c0_i32_1 = arith.constant 0 : i32
    return %c0_i32, %c0_i32_0 : i32, i32
  }
  func.func @transform_2(%arg0: i32) -> (i32, i32) {
    %c0_i32 = arith.constant 0 : i32
    %c0_i32_0 = arith.constant 0 : i32
    %c0_i32_1 = arith.constant 0 : i32
    return %c0_i32, %c0_i32_0 : i32, i32
  }
  func.func @transform_3(%arg0: i32) -> (i32, i32) {
    %c0_i32 = arith.constant 0 : i32
    %c0_i32_0 = arith.constant 0 : i32
    %c0_i32_1 = arith.constant 0 : i32
    return %c0_i32, %c0_i32_0 : i32, i32
  }
  func.func @transform_4(%arg0: i32) -> (i32, i32) {
    %c0_i32 = arith.constant 0 : i32
    %c0_i32_0 = arith.constant 0 : i32
    %c0_i32_1 = arith.constant 0 : i32
    return %c0_i32, %c0_i32_0 : i32, i32
  }
  func.func @transform_5(%arg0: i32) -> (i32, i32) {
    %c0_i32 = arith.constant 0 : i32
    %c0_i32_0 = arith.constant 0 : i32
    return %arg0, %c0_i32 : i32, i32
  }
}

module attributes {stable_mosaic.version = 11 : i64} {
  func.func @kernel(%arg0: i32, %arg1: i32, %arg2: i32, %arg3: i32, %arg4: memref<1x1x8x8xbf16, #tpu.memory_space<vmem>>, %arg5: memref<1x1x8x8xbf16, #tpu.memory_space<vmem>>, %arg6: memref<1x1x8x8xbf16, #tpu.memory_space<vmem>>, %arg7: memref<1x1x8x8xbf16, #tpu.memory_space<vmem>>, %arg8: memref<1x1x8x8xbf16, #tpu.memory_space<vmem>>, %arg9: memref<1x1x8x8xbf16, #tpu.memory_space<vmem>>, %arg10: memref<1x1x8x8xbf16, #tpu.memory_space<vmem>>, %arg11: memref<1x1x8x8xbf16, #tpu.memory_space<vmem>>, %arg12: memref<1x1x8x8xbf16, #tpu.memory_space<vmem>>, %arg13: memref<8x1xf32, #tpu.memory_space<vmem>>, %arg14: memref<8x1xf32, #tpu.memory_space<vmem>>, %arg15: memref<8x8xf32, #tpu.memory_space<vmem>>) attributes {dimension_semantics = [#tpu.dimension_semantics<parallel>, #tpu.dimension_semantics<parallel>, #tpu.dimension_semantics<parallel>, #tpu.dimension_semantics<arbitrary>], iteration_bounds = array<i64: 2, 4, 1, 1>, scalar_prefetch = 0 : i64, scratch_operands = 3 : i64, tpu.core_type = #tpu.core_type<tc>, window_params = [{transform_indices = @transform_0, window_bounds = array<i64: 1, 1, 8, 8>}, {transform_indices = @transform_1, window_bounds = array<i64: 1, 1, 8, 8>}, {transform_indices = @transform_2, window_bounds = array<i64: 1, 1, 8, 8>}, {transform_indices = @transform_3, window_bounds = array<i64: 1, 1, 8, 8>}, {transform_indices = @transform_4, window_bounds = array<i64: 1, 1, 8, 8>}, {transform_indices = @transform_5, window_bounds = array<i64: 1, 1, 8, 8>}, {transform_indices = @transform_6, window_bounds = array<i64: 1, 1, 8, 8>}, {transform_indices = @transform_7, window_bounds = array<i64: 1, 1, 8, 8>}, {transform_indices = @transform_8, window_bounds = array<i64: 1, 1, 8, 8>}]} {
    %c0_i32 = arith.constant 0 : i32
    %0 = arith.cmpi eq, %arg3, %c0_i32 : i32
    %1 = arith.extui %0 : i1 to i32
    %c0_i32_0 = arith.constant 0 : i32
    %2 = arith.cmpi ne, %1, %c0_i32_0 : i32
    scf.if %2 {
      %cst_52 = arith.constant 0xFF800000 : f32
      %68 = vector.broadcast %cst_52 : f32 to vector<8x1xf32>
      %c0_53 = arith.constant 0 : index
      %c0_54 = arith.constant 0 : index
      %69 = vector.load %arg13[%c0_53, %c0_54] : memref<8x1xf32, #tpu.memory_space<vmem>>, vector<8x1xf32>
      tpu.vector_store %arg13[%c0_53, %c0_54], %68 {strides = array<i32>} : memref<8x1xf32, #tpu.memory_space<vmem>>, vector<8x1xf32>,
      %cst_55 = arith.constant 0.000000e+00 : f32
      %70 = vector.broadcast %cst_55 : f32 to vector<8x1xf32>
      %c0_56 = arith.constant 0 : index
      %c0_57 = arith.constant 0 : index
      %71 = vector.load %arg14[%c0_56, %c0_57] : memref<8x1xf32, #tpu.memory_space<vmem>>, vector<8x1xf32>
      tpu.vector_store %arg14[%c0_56, %c0_57], %70 {strides = array<i32>} : memref<8x1xf32, #tpu.memory_space<vmem>>, vector<8x1xf32>,
      %cst_58 = arith.constant 0.000000e+00 : f32
      %72 = vector.broadcast %cst_58 : f32 to vector<8x8xf32>
      %c0_59 = arith.constant 0 : index
      %c0_60 = arith.constant 0 : index
      %73 = vector.load %arg15[%c0_59, %c0_60] : memref<8x8xf32, #tpu.memory_space<vmem>>, vector<8x8xf32>
      tpu.vector_store %arg15[%c0_59, %c0_60], %72 {strides = array<i32>} : memref<8x8xf32, #tpu.memory_space<vmem>>, vector<8x8xf32>,
    } else {
    }
    %c0 = arith.constant 0 : index
    %c0_1 = arith.constant 0 : index
    %c0_2 = arith.constant 0 : index
    %c0_3 = arith.constant 0 : index
    %3 = vector.load %arg4[%c0, %c0_1, %c0_2, %c0_3] : memref<1x1x8x8xbf16, #tpu.memory_space<vmem>>, vector<1x1x8x8xbf16>
    %4 = vector.shape_cast %3 : vector<1x1x8x8xbf16> to vector<8x8xbf16>
    %c0_4 = arith.constant 0 : index
    %c0_5 = arith.constant 0 : index
    %c0_6 = arith.constant 0 : index
    %c0_7 = arith.constant 0 : index
    %5 = vector.load %arg5[%c0_4, %c0_5, %c0_6, %c0_7] : memref<1x1x8x8xbf16, #tpu.memory_space<vmem>>, vector<1x1x8x8xbf16>
    %6 = vector.shape_cast %5 : vector<1x1x8x8xbf16> to vector<8x8xbf16>
    %c0_8 = arith.constant 0 : index
    %c0_9 = arith.constant 0 : index
    %c0_10 = arith.constant 0 : index
    %c0_11 = arith.constant 0 : index
    %7 = vector.load %arg6[%c0_8, %c0_9, %c0_10, %c0_11] : memref<1x1x8x8xbf16, #tpu.memory_space<vmem>>, vector<1x1x8x8xbf16>
    %8 = vector.shape_cast %7 : vector<1x1x8x8xbf16> to vector<8x8xbf16>
    %c0_12 = arith.constant 0 : index
    %c0_13 = arith.constant 0 : index
    %c0_14 = arith.constant 0 : index
    %c0_15 = arith.constant 0 : index
    %9 = vector.load %arg7[%c0_12, %c0_13, %c0_14, %c0_15] : memref<1x1x8x8xbf16, #tpu.memory_space<vmem>>, vector<1x1x8x8xbf16>
    %10 = vector.shape_cast %9 : vector<1x1x8x8xbf16> to vector<8x8xbf16>
    %c0_16 = arith.constant 0 : index
    %c0_17 = arith.constant 0 : index
    %c0_18 = arith.constant 0 : index
    %c0_19 = arith.constant 0 : index
    %11 = vector.load %arg8[%c0_16, %c0_17, %c0_18, %c0_19] : memref<1x1x8x8xbf16, #tpu.memory_space<vmem>>, vector<1x1x8x8xbf16>
    %12 = vector.shape_cast %11 : vector<1x1x8x8xbf16> to vector<8x8xbf16>
    %c0_20 = arith.constant 0 : index
    %c0_21 = arith.constant 0 : index
    %c0_22 = arith.constant 0 : index
    %c0_23 = arith.constant 0 : index
    %13 = vector.load %arg9[%c0_20, %c0_21, %c0_22, %c0_23] : memref<1x1x8x8xbf16, #tpu.memory_space<vmem>>, vector<1x1x8x8xbf16>
    %14 = vector.shape_cast %13 : vector<1x1x8x8xbf16> to vector<8x8xbf16>
    %15 = tpu.concatenate %8, %12, %14 in 0 : vector<8x8xbf16>, vector<8x8xbf16>, vector<8x8xbf16> -> vector<24x8xbf16>
    %cst = arith.constant dense<0.000000e+00> : vector<8x24xf32>
    %16 = tpu.matmul %4, %15, %cst {dimension_numbers = #tpu.dot_dimension_numbers<[1], [1], [0], [0], [0, 0, 1, 0], [], []>} : vector<8x8xbf16>, vector<24x8xbf16>, vector<8x24xf32> -> vector<8x24xf32>
    %c0_24 = arith.constant 0 : index
    %c0_25 = arith.constant 0 : index
    %c0_26 = arith.constant 0 : index
    %c0_27 = arith.constant 0 : index
    %17 = vector.load %arg10[%c0_24, %c0_25, %c0_26, %c0_27] : memref<1x1x8x8xbf16, #tpu.memory_space<vmem>>, vector<1x1x8x8xbf16>
    %18 = vector.shape_cast %17 : vector<1x1x8x8xbf16> to vector<8x8xbf16>
    %c0_28 = arith.constant 0 : index
    %c0_29 = arith.constant 0 : index
    %c0_30 = arith.constant 0 : index
    %c0_31 = arith.constant 0 : index
    %19 = vector.load %arg11[%c0_28, %c0_29, %c0_30, %c0_31] : memref<1x1x8x8xbf16, #tpu.memory_space<vmem>>, vector<1x1x8x8xbf16>
    %20 = vector.shape_cast %19 : vector<1x1x8x8xbf16> to vector<8x8xbf16>
    %21 = tpu.concatenate %18, %20 in 0 : vector<8x8xbf16>, vector<8x8xbf16> -> vector<16x8xbf16>
    %cst_32 = arith.constant dense<0.000000e+00> : vector<8x16xf32>
    %22 = tpu.matmul %6, %21, %cst_32 {dimension_numbers = #tpu.dot_dimension_numbers<[1], [1], [0], [0], [0, 0, 1, 0], [], []>} : vector<8x8xbf16>, vector<16x8xbf16>, vector<8x16xf32> -> vector<8x16xf32>
    %23 = vector.extract_strided_slice %16 {offsets = [0, 8], sizes = [8, 16], strides = [1, 1]} : vector<8x24xf32> to vector<8x16xf32>
    %24 = arith.addf %23, %22 : vector<8x16xf32>
    %25 = vector.extract_strided_slice %16 {offsets = [0, 0], sizes = [8, 8], strides = [1, 1]} : vector<8x24xf32> to vector<8x8xf32>
    %26 = tpu.iota {dimensions = array<i32: 1>} : vector<8x8xi32>
    %27 = tpu.iota {dimensions = array<i32: 0>} : vector<8x8xi32>
    %28 = arith.subi %26, %27 : vector<8x8xi32>
    %c8_i32 = arith.constant 8 : i32
    %29 = vector.broadcast %c8_i32 : i32 to vector<8x8xi32>
    %30 = arith.addi %28, %29 : vector<8x8xi32>
    %31 = tpu.iota {dimensions = array<i32: 2>} : vector<8x8x16xi32>
    %32 = vector.shape_cast %30 : vector<8x8xi32> to vector<8x8x1xi32>
    %33 = vector.broadcast %32 : vector<8x8x1xi32> to vector<8x8x16xi32>
    %34 = arith.cmpi eq, %31, %33 : vector<8x8x16xi32>
    %35 = vector.shape_cast %24 : vector<8x16xf32> to vector<8x1x16xf32>
    %cst_33 = arith.constant 0.000000e+00 : f32
    %36 = vector.shape_cast %35 : vector<8x1x16xf32> to vector<8x1x16xf32>
    %37 = vector.broadcast %36 : vector<8x1x16xf32> to vector<8x8x16xf32>
    %38 = vector.broadcast %cst_33 : f32 to vector<8x8x16xf32>
    %39 = arith.select %34, %37, %38 : vector<8x8x16xi1>, vector<8x8x16xf32>
    %cst_34 = arith.constant dense<0.000000e+00> : vector<8x8xf32>
    %40 = vector.multi_reduction <add>, %39, %cst_34 [2] : vector<8x8x16xf32> to vector<8x8xf32>
    %41 = arith.addf %25, %40 : vector<8x8xf32>
    %c0_35 = arith.constant 0 : index
    %c0_36 = arith.constant 0 : index
    %42 = vector.load %arg13[%c0_35, %c0_36] : memref<8x1xf32, #tpu.memory_space<vmem>>, vector<8x1xf32>
    %cst_37 = arith.constant dense<0xFF800000> : vector<8xf32>
    %43 = vector.multi_reduction <maximumf>, %41, %cst_37 [1] : vector<8x8xf32> to vector<8xf32>
    %44 = vector.shape_cast %43 : vector<8xf32> to vector<8x1xf32>
    %45 = arith.maximumf %42, %44 : vector<8x1xf32>
    %46 = arith.subf %42, %45 : vector<8x1xf32>
    %47 = math.exp %46 : vector<8x1xf32>
    %48 = vector.broadcast %45 : vector<8x1xf32> to vector<8x8xf32>
    %49 = arith.subf %41, %48 : vector<8x8xf32>
    %50 = math.exp %49 : vector<8x8xf32>
    %c0_38 = arith.constant 0 : index
    %c0_39 = arith.constant 0 : index
    %51 = vector.load %arg14[%c0_38, %c0_39] : memref<8x1xf32, #tpu.memory_space<vmem>>, vector<8x1xf32>
    %52 = arith.mulf %47, %51 : vector<8x1xf32>
    %cst_40 = arith.constant dense<0.000000e+00> : vector<8xf32>
    %53 = vector.multi_reduction <add>, %50, %cst_40 [1] : vector<8x8xf32> to vector<8xf32>
    %54 = vector.shape_cast %53 : vector<8xf32> to vector<8x1xf32>
    %55 = arith.addf %52, %54 : vector<8x1xf32>
    %c0_41 = arith.constant 0 : index
    %c0_42 = arith.constant 0 : index
    %56 = vector.load %arg14[%c0_41, %c0_42] : memref<8x1xf32, #tpu.memory_space<vmem>>, vector<8x1xf32>
    tpu.vector_store %arg14[%c0_41, %c0_42], %55 {strides = array<i32>} : memref<8x1xf32, #tpu.memory_space<vmem>>, vector<8x1xf32>,
    %c0_43 = arith.constant 0 : index
    %c0_44 = arith.constant 0 : index
    %57 = vector.load %arg15[%c0_43, %c0_44] : memref<8x8xf32, #tpu.memory_space<vmem>>, vector<8x8xf32>
    %58 = vector.broadcast %47 : vector<8x1xf32> to vector<8x8xf32>
    %59 = arith.mulf %58, %57 : vector<8x8xf32>
    %60 = arith.truncf %50 : vector<8x8xf32> to vector<8x8xbf16>
    %cst_45 = arith.constant dense<0.000000e+00> : vector<8x8xf32>
    %61 = tpu.matmul %60, %10, %cst_45 {dimension_numbers = #tpu.dot_dimension_numbers<[1], [0], [0], [1], [0, 0, 1, 1], [], []>} : vector<8x8xbf16>, vector<8x8xbf16>, vector<8x8xf32> -> vector<8x8xf32>
    %62 = arith.addf %59, %61 : vector<8x8xf32>
    %c0_46 = arith.constant 0 : index
    %c0_47 = arith.constant 0 : index
    %63 = vector.load %arg15[%c0_46, %c0_47] : memref<8x8xf32, #tpu.memory_space<vmem>>, vector<8x8xf32>
    tpu.vector_store %arg15[%c0_46, %c0_47], %62 {strides = array<i32>} : memref<8x8xf32, #tpu.memory_space<vmem>>, vector<8x8xf32>,
    %c0_48 = arith.constant 0 : index
    %c0_49 = arith.constant 0 : index
    %64 = vector.load %arg13[%c0_48, %c0_49] : memref<8x1xf32, #tpu.memory_space<vmem>>, vector<8x1xf32>
    tpu.vector_store %arg13[%c0_48, %c0_49], %45 {strides = array<i32>} : memref<8x1xf32, #tpu.memory_space<vmem>>, vector<8x1xf32>,
    %c0_i32_50 = arith.constant 0 : i32
    %65 = arith.cmpi eq, %arg3, %c0_i32_50 : i32
    %66 = arith.extui %65 : i1 to i32
    %c0_i32_51 = arith.constant 0 : i32
    %67 = arith.cmpi ne, %66, %c0_i32_51 : i32
    scf.if %67 {
      %c0_52 = arith.constant 0 : index
      %c0_53 = arith.constant 0 : index
      %68 = vector.load %arg15[%c0_52, %c0_53] : memref<8x8xf32, #tpu.memory_space<vmem>>, vector<8x8xf32>
      %c0_54 = arith.constant 0 : index
      %c0_55 = arith.constant 0 : index
      %69 = vector.load %arg14[%c0_54, %c0_55] : memref<8x1xf32, #tpu.memory_space<vmem>>, vector<8x1xf32>
      %70 = vector.broadcast %69 : vector<8x1xf32> to vector<8x8xf32>
      %71 = arith.divf %68, %70 : vector<8x8xf32>
      %72 = arith.truncf %71 : vector<8x8xf32> to vector<8x8xbf16>
      %c0_56 = arith.constant 0 : index
      %c0_57 = arith.constant 0 : index
      %c0_58 = arith.constant 0 : index
      %c0_59 = arith.constant 0 : index
      %73 = vector.load %arg12[%c0_56, %c0_57, %c0_58, %c0_59] : memref<1x1x8x8xbf16, #tpu.memory_space<vmem>>, vector<1x1x8x8xbf16>
      %74 = vector.shape_cast %73 : vector<1x1x8x8xbf16> to vector<8x8xbf16>
      %75 = vector.shape_cast %72 : vector<8x8xbf16> to vector<1x1x8x8xbf16>
      tpu.vector_store %arg12[%c0_56, %c0_57, %c0_58, %c0_59], %75 {strides = array<i32>} : memref<1x1x8x8xbf16, #tpu.memory_space<vmem>>, vector<1x1x8x8xbf16>,
    } else {
    }
    return
  }
  func.func @transform_0(%arg0: i32, %arg1: i32, %arg2: i32, %arg3: i32) -> (i32, i32, i32, i32) {
    %c0_i32 = arith.constant 0 : i32
    %c0_i32_0 = arith.constant 0 : i32
    return %arg0, %arg1, %arg2, %c0_i32 : i32, i32, i32, i32
  }
  func.func @transform_1(%arg0: i32, %arg1: i32, %arg2: i32, %arg3: i32) -> (i32, i32, i32, i32) {
    %c0_i32 = arith.constant 0 : i32
    %c0_i32_0 = arith.constant 0 : i32
    return %arg0, %arg1, %arg2, %c0_i32 : i32, i32, i32, i32
  }
  func.func @transform_2(%arg0: i32, %arg1: i32, %arg2: i32, %arg3: i32) -> (i32, i32, i32, i32) {
    %c0_i32 = arith.constant 0 : i32
    %c0_i32_0 = arith.constant 0 : i32
    return %arg0, %arg1, %arg3, %c0_i32 : i32, i32, i32, i32
  }
  func.func @transform_3(%arg0: i32, %arg1: i32, %arg2: i32, %arg3: i32) -> (i32, i32, i32, i32) {
    %c0_i32 = arith.constant 0 : i32
    %c0_i32_0 = arith.constant 0 : i32
    return %arg0, %arg1, %arg3, %c0_i32 : i32, i32, i32, i32
  }
  func.func @transform_4(%arg0: i32, %arg1: i32, %arg2: i32, %arg3: i32) -> (i32, i32, i32, i32) {
    %0 = arith.subi %arg3, %arg2 : i32
    %c1_i32 = arith.constant 1 : i32
    %1 = arith.addi %0, %c1_i32 : i32
    %c1_i32_0 = arith.constant 1 : i32
    %2 = arith.subi %1, %c1_i32_0 : i32
    %c0_i32 = arith.constant 0 : i32
    %c0_i32_1 = arith.constant 0 : i32
    %c0_i32_2 = arith.constant 0 : i32
    return %arg1, %2, %c0_i32, %c0_i32_1 : i32, i32, i32, i32
  }
  func.func @transform_5(%arg0: i32, %arg1: i32, %arg2: i32, %arg3: i32) -> (i32, i32, i32, i32) {
    %0 = arith.subi %arg3, %arg2 : i32
    %c1_i32 = arith.constant 1 : i32
    %1 = arith.addi %0, %c1_i32 : i32
    %c0_i32 = arith.constant 0 : i32
    %c0_i32_0 = arith.constant 0 : i32
    %c0_i32_1 = arith.constant 0 : i32
    return %arg1, %1, %c0_i32, %c0_i32_0 : i32, i32, i32, i32
  }
  func.func @transform_6(%arg0: i32, %arg1: i32, %arg2: i32, %arg3: i32) -> (i32, i32, i32, i32) {
    %0 = arith.subi %arg3, %arg2 : i32
    %c1_i32 = arith.constant 1 : i32
    %1 = arith.addi %0, %c1_i32 : i32
    %c1_i32_0 = arith.constant 1 : i32
    %2 = arith.subi %1, %c1_i32_0 : i32
    %c0_i32 = arith.constant 0 : i32
    %c0_i32_1 = arith.constant 0 : i32
    %c0_i32_2 = arith.constant 0 : i32
    return %arg1, %2, %c0_i32, %c0_i32_1 : i32, i32, i32, i32
  }
  func.func @transform_7(%arg0: i32, %arg1: i32, %arg2: i32, %arg3: i32) -> (i32, i32, i32, i32) {
    %0 = arith.subi %arg3, %arg2 : i32
    %c1_i32 = arith.constant 1 : i32
    %1 = arith.addi %0, %c1_i32 : i32
    %c0_i32 = arith.constant 0 : i32
    %c0_i32_0 = arith.constant 0 : i32
    %c0_i32_1 = arith.constant 0 : i32
    return %arg1, %1, %c0_i32, %c0_i32_0 : i32, i32, i32, i32
  }
  func.func @transform_8(%arg0: i32, %arg1: i32, %arg2: i32, %arg3: i32) -> (i32, i32, i32, i32) {
    %c0_i32 = arith.constant 0 : i32
    %c0_i32_0 = arith.constant 0 : i32
    return %arg0, %arg1, %arg2, %c0_i32 : i32, i32, i32, i32
  }
}

module attributes {stable_mosaic.version = 11 : i64} {
  func.func @_outproj_ln_mlp_kernel(%arg0: i32, %arg1: memref<16x32xbf16, #tpu.memory_space<vmem>>, %arg2: memref<16x32xf32, #tpu.memory_space<vmem>>, %arg3: memref<32x32xbf16, #tpu.memory_space<vmem>>, %arg4: memref<1x32xf32, #tpu.memory_space<vmem>>, %arg5: memref<1x32xf32, #tpu.memory_space<vmem>>, %arg6: memref<1x32xf32, #tpu.memory_space<vmem>>, %arg7: memref<32x64xbf16, #tpu.memory_space<vmem>>, %arg8: memref<1x64xf32, #tpu.memory_space<vmem>>, %arg9: memref<64x32xbf16, #tpu.memory_space<vmem>>, %arg10: memref<1x32xf32, #tpu.memory_space<vmem>>, %arg11: memref<16x32xf32, #tpu.memory_space<vmem>>) attributes {dimension_semantics = [#tpu.dimension_semantics<parallel>], iteration_bounds = array<i64: 1>, scalar_prefetch = 0 : i64, scratch_operands = 0 : i64, tpu.core_type = #tpu.core_type<tc>, window_params = [{transform_indices = @transform_0, window_bounds = array<i64: 16, 32>}, {transform_indices = @transform_1, window_bounds = array<i64: 16, 32>}, {pipeline_mode = #tpu.pipeline_mode<synchronous>, transform_indices = @transform_2, window_bounds = array<i64: 32, 32>}, {pipeline_mode = #tpu.pipeline_mode<synchronous>, transform_indices = @transform_3, window_bounds = array<i64: 1, 32>}, {pipeline_mode = #tpu.pipeline_mode<synchronous>, transform_indices = @transform_4, window_bounds = array<i64: 1, 32>}, {pipeline_mode = #tpu.pipeline_mode<synchronous>, transform_indices = @transform_5, window_bounds = array<i64: 1, 32>}, {pipeline_mode = #tpu.pipeline_mode<synchronous>, transform_indices = @transform_6, window_bounds = array<i64: 32, 64>}, {pipeline_mode = #tpu.pipeline_mode<synchronous>, transform_indices = @transform_7, window_bounds = array<i64: 1, 64>}, {pipeline_mode = #tpu.pipeline_mode<synchronous>, transform_indices = @transform_8, window_bounds = array<i64: 64, 32>}, {pipeline_mode = #tpu.pipeline_mode<synchronous>, transform_indices = @transform_9, window_bounds = array<i64: 1, 32>}, {transform_indices = @transform_10, window_bounds = array<i64: 16, 32>}]} {
    %c0 = arith.constant 0 : index
    %c0_0 = arith.constant 0 : index
    %0 = vector.load %arg1[%c0, %c0_0] : memref<16x32xbf16, #tpu.memory_space<vmem>>, vector<16x32xbf16>
    %c0_1 = arith.constant 0 : index
    %c0_2 = arith.constant 0 : index
    %1 = vector.load %arg3[%c0_1, %c0_2] : memref<32x32xbf16, #tpu.memory_space<vmem>>, vector<32x32xbf16>
    %cst = arith.constant dense<0.000000e+00> : vector<16x32xf32>
    %2 = tpu.matmul %0, %1, %cst {dimension_numbers = #tpu.dot_dimension_numbers<[1], [0], [0], [1], [0, 0, 1, 1], [], []>} : vector<16x32xbf16>, vector<32x32xbf16>, vector<16x32xf32> -> vector<16x32xf32>
    %c0_3 = arith.constant 0 : index
    %c0_4 = arith.constant 0 : index
    %3 = vector.load %arg4[%c0_3, %c0_4] : memref<1x32xf32, #tpu.memory_space<vmem>>, vector<1x32xf32>
    %4 = vector.broadcast %3 : vector<1x32xf32> to vector<16x32xf32>
    %5 = arith.addf %2, %4 : vector<16x32xf32>
    %c0_5 = arith.constant 0 : index
    %c0_6 = arith.constant 0 : index
    %6 = vector.load %arg2[%c0_5, %c0_6] : memref<16x32xf32, #tpu.memory_space<vmem>>, vector<16x32xf32>
    %7 = arith.addf %6, %5 : vector<16x32xf32>
    %cst_7 = arith.constant dense<0.000000e+00> : vector<16xf32>
    %8 = vector.multi_reduction <add>, %7, %cst_7 [1] : vector<16x32xf32> to vector<16xf32>
    %9 = vector.shape_cast %8 : vector<16xf32> to vector<16x1xf32>
    %cst_8 = arith.constant 3.200000e+01 : f32
    %10 = vector.broadcast %cst_8 : f32 to vector<16x1xf32>
    %11 = arith.divf %9, %10 : vector<16x1xf32>
    %12 = vector.broadcast %11 : vector<16x1xf32> to vector<16x32xf32>
    %13 = arith.subf %7, %12 : vector<16x32xf32>
    %14 = arith.mulf %13, %13 : vector<16x32xf32>
    %cst_9 = arith.constant dense<0.000000e+00> : vector<16xf32>
    %15 = vector.multi_reduction <add>, %14, %cst_9 [1] : vector<16x32xf32> to vector<16xf32>
    %16 = vector.shape_cast %15 : vector<16xf32> to vector<16x1xf32>
    %cst_10 = arith.constant 3.200000e+01 : f32
    %17 = vector.broadcast %cst_10 : f32 to vector<16x1xf32>
    %18 = arith.divf %16, %17 : vector<16x1xf32>
    %19 = vector.broadcast %11 : vector<16x1xf32> to vector<16x32xf32>
    %20 = arith.subf %7, %19 : vector<16x32xf32>
    %cst_11 = arith.constant 9.99999974E-6 : f32
    %21 = vector.broadcast %cst_11 : f32 to vector<16x1xf32>
    %22 = arith.addf %18, %21 : vector<16x1xf32>
    %23 = math.rsqrt %22 : vector<16x1xf32>
    %24 = vector.broadcast %23 : vector<16x1xf32> to vector<16x32xf32>
    %25 = arith.mulf %20, %24 : vector<16x32xf32>
    %c0_12 = arith.constant 0 : index
    %c0_13 = arith.constant 0 : index
    %26 = vector.load %arg5[%c0_12, %c0_13] : memref<1x32xf32, #tpu.memory_space<vmem>>, vector<1x32xf32>
    %27 = vector.broadcast %26 : vector<1x32xf32> to vector<16x32xf32>
    %28 = arith.mulf %25, %27 : vector<16x32xf32>
    %c0_14 = arith.constant 0 : index
    %c0_15 = arith.constant 0 : index
    %29 = vector.load %arg6[%c0_14, %c0_15] : memref<1x32xf32, #tpu.memory_space<vmem>>, vector<1x32xf32>
    %30 = vector.broadcast %29 : vector<1x32xf32> to vector<16x32xf32>
    %31 = arith.addf %28, %30 : vector<16x32xf32>
    %32 = arith.truncf %31 : vector<16x32xf32> to vector<16x32xbf16>
    %c0_16 = arith.constant 0 : index
    %c0_17 = arith.constant 0 : index
    %33 = vector.load %arg7[%c0_16, %c0_17] : memref<32x64xbf16, #tpu.memory_space<vmem>>, vector<32x64xbf16>
    %cst_18 = arith.constant dense<0.000000e+00> : vector<16x64xf32>
    %34 = tpu.matmul %32, %33, %cst_18 {dimension_numbers = #tpu.dot_dimension_numbers<[1], [0], [0], [1], [0, 0, 1, 1], [], []>} : vector<16x32xbf16>, vector<32x64xbf16>, vector<16x64xf32> -> vector<16x64xf32>
    %c0_19 = arith.constant 0 : index
    %c0_20 = arith.constant 0 : index
    %35 = vector.load %arg8[%c0_19, %c0_20] : memref<1x64xf32, #tpu.memory_space<vmem>>, vector<1x64xf32>
    %36 = vector.broadcast %35 : vector<1x64xf32> to vector<16x64xf32>
    %37 = arith.addf %34, %36 : vector<16x64xf32>
    %cst_21 = arith.constant 0.000000e+00 : f32
    %38 = vector.broadcast %cst_21 : f32 to vector<16x64xf32>
    %39 = arith.maximumf %37, %38 : vector<16x64xf32>
    %40 = arith.truncf %39 : vector<16x64xf32> to vector<16x64xbf16>
    %c0_22 = arith.constant 0 : index
    %c0_23 = arith.constant 0 : index
    %41 = vector.load %arg9[%c0_22, %c0_23] : memref<64x32xbf16, #tpu.memory_space<vmem>>, vector<64x32xbf16>
    %cst_24 = arith.constant dense<0.000000e+00> : vector<16x32xf32>
    %42 = tpu.matmul %40, %41, %cst_24 {dimension_numbers = #tpu.dot_dimension_numbers<[1], [0], [0], [1], [0, 0, 1, 1], [], []>} : vector<16x64xbf16>, vector<64x32xbf16>, vector<16x32xf32> -> vector<16x32xf32>
    %c0_25 = arith.constant 0 : index
    %c0_26 = arith.constant 0 : index
    %43 = vector.load %arg10[%c0_25, %c0_26] : memref<1x32xf32, #tpu.memory_space<vmem>>, vector<1x32xf32>
    %44 = vector.broadcast %43 : vector<1x32xf32> to vector<16x32xf32>
    %45 = arith.addf %42, %44 : vector<16x32xf32>
    %46 = arith.addf %7, %45 : vector<16x32xf32>
    %c0_27 = arith.constant 0 : index
    %c0_28 = arith.constant 0 : index
    %47 = vector.load %arg11[%c0_27, %c0_28] : memref<16x32xf32, #tpu.memory_space<vmem>>, vector<16x32xf32>
    tpu.vector_store %arg11[%c0_27, %c0_28], %46 {strides = array<i32>} : memref<16x32xf32, #tpu.memory_space<vmem>>, vector<16x32xf32>,
    return
  }
  func.func @transform_0(%arg0: i32) -> (i32, i32) {
    %c0_i32 = arith.constant 0 : i32
    %c0_i32_0 = arith.constant 0 : i32
    return %arg0, %c0_i32 : i32, i32
  }
  func.func @transform_1(%arg0: i32) -> (i32, i32) {
    %c0_i32 = arith.constant 0 : i32
    %c0_i32_0 = arith.constant 0 : i32
    return %arg0, %c0_i32 : i32, i32
  }
  func.func @transform_2(%arg0: i32) -> (i32, i32) {
    %c0_i32 = arith.constant 0 : i32
    %c0_i32_0 = arith.constant 0 : i32
    %c0_i32_1 = arith.constant 0 : i32
    return %c0_i32, %c0_i32_0 : i32, i32
  }
  func.func @transform_3(%arg0: i32) -> (i32, i32) {
    %c0_i32 = arith.constant 0 : i32
    %c0_i32_0 = arith.constant 0 : i32
    %c0_i32_1 = arith.constant 0 : i32
    return %c0_i32, %c0_i32_0 : i32, i32
  }
  func.func @transform_4(%arg0: i32) -> (i32, i32) {
    %c0_i32 = arith.constant 0 : i32
    %c0_i32_0 = arith.constant 0 : i32
    %c0_i32_1 = arith.constant 0 : i32
    return %c0_i32, %c0_i32_0 : i32, i32
  }
  func.func @transform_5(%arg0: i32) -> (i32, i32) {
    %c0_i32 = arith.constant 0 : i32
    %c0_i32_0 = arith.constant 0 : i32
    %c0_i32_1 = arith.constant 0 : i32
    return %c0_i32, %c0_i32_0 : i32, i32
  }
  func.func @transform_6(%arg0: i32) -> (i32, i32) {
    %c0_i32 = arith.constant 0 : i32
    %c0_i32_0 = arith.constant 0 : i32
    %c0_i32_1 = arith.constant 0 : i32
    return %c0_i32, %c0_i32_0 : i32, i32
  }
  func.func @transform_7(%arg0: i32) -> (i32, i32) {
    %c0_i32 = arith.constant 0 : i32
    %c0_i32_0 = arith.constant 0 : i32
    %c0_i32_1 = arith.constant 0 : i32
    return %c0_i32, %c0_i32_0 : i32, i32
  }
  func.func @transform_8(%arg0: i32) -> (i32, i32) {
    %c0_i32 = arith.constant 0 : i32
    %c0_i32_0 = arith.constant 0 : i32
    %c0_i32_1 = arith.constant 0 : i32
    return %c0_i32, %c0_i32_0 : i32, i32
  }
  func.func @transform_9(%arg0: i32) -> (i32, i32) {
    %c0_i32 = arith.constant 0 : i32
    %c0_i32_0 = arith.constant 0 : i32
    %c0_i32_1 = arith.constant 0 : i32
    return %c0_i32, %c0_i32_0 : i32, i32
  }
  func.func @transform_10(%arg0: i32) -> (i32, i32) {
    %c0_i32 = arith.constant 0 : i32
    %c0_i32_0 = arith.constant 0 : i32
    return %arg0, %c0_i32 : i32, i32
  }
}

</mosaic_0001>

<llo_original>
// kernel: disentangled_transformer_block.5
$region0: #{disentangled_transformer_block.5}
  #allocation0 [shape = 'u32[]', space=smem, size = 0x4, offset = 0x4, fixed_abs, tag = 'smem constant byte address 0x4 - core index']
  #allocation1 [shape = 'u32[72,128]{1,0:T(1,128)}', space=vmem, size = 0x9000, scoped, tag = 'internal scratch']
  %s0 = inlined_call_operand.vmem [shape: f32[32,32], index: 0, kind: input, shape index: {}]
  %s1 = inlined_call_operand.vmem [shape: bf16[32,64], index: 1, kind: input, shape index: {}]
  %s2 = inlined_call_operand.vmem [shape: f32[1,64], index: 2, kind: input, shape index: {}]
  %s3 = inlined_call_operand.vmem [shape: f32[32,64], index: 3, kind: output, shape index: {}]
  %s4 = sld [smem:[#allocation0]]
  $region22: #{disentangled_transformer_block.5} parent=0
    _
  %s6 = ssub.s32 1, %s4
  %s7 = scalar_select 0, %s6, %s4
  // Predicated region
  $region2: #{disentangled_transformer_block.5} parent=0 // pred_check
    _
  $region3: #{disentangled_transformer_block.5} parent=0 // pred_check_branch
    %9 = sbr.rel (0) target = $region5
  $region4: #{disentangled_transformer_block.5} parent=0 // pred_region
    _
  $region5: #{disentangled_transformer_block.5} parent=0 // pred_fallthru
    _
  // Predicated region
  $region6: #{disentangled_transformer_block.5} parent=0 // pred_check
    _
  $region7: #{disentangled_transformer_block.5} parent=0 // pred_check_branch
    %11 = sbr.rel (0) target = $region9
  $region8: #{disentangled_transformer_block.5} parent=0 // pred_region
    _
  $region9: #{disentangled_transformer_block.5} parent=0 // pred_fallthru
    _
  // Predicated region
  $region10: #{disentangled_transformer_block.5} parent=0 // pred_check
    _
  $region11: #{disentangled_transformer_block.5} parent=0 // pred_check_branch
    %13 = sbr.rel (0) target = $region13
  $region12: #{disentangled_transformer_block.5} parent=0 // pred_region
    _
  $region13: #{disentangled_transformer_block.5} parent=0 // pred_fallthru
    _
  %v15 = vld [vmem:[%s0] sm:$0xff]
  %v16 = vld [vmem:[%s0 + $0x8] sm:$0xff]
  %v17 = vld [vmem:[%s0 + $0x10] sm:$0xff]
  %v18 = vld [vmem:[%s0 + $0x18] sm:$0xff]
  %v19 = vpack.c.bf16 %v16, %v15
  %v20 = vpack.c.bf16 %v18, %v17
  %v21 = vld [vmem:[%s1] sm:$0xf]
  %v22 = vld [vmem:[%s1 + $0x4] sm:$0xf]
  %v23 = vld [vmem:[%s1 + $0x8] sm:$0xf]
  %v24 = vld [vmem:[%s1 + $0xc] sm:$0xf]
  %v25 = vld [vmem:[%s2] sm:$0x1]
  %v27 = vperm.slane %v25, 0
  %v33 = vunpack.c.l.b16 %v21
  %v34 = vunpack.c.l.b16 %v22
  %v35 = vunpack.c.l.b16 %v23
  %v36 = vunpack.c.l.b16 %v24
  %v37 = vpack.c.b16 %v34, %v33
  %v38 = vpack.c.b16 %v36, %v35
  %vm41 = vcmask 261120
  %v43 = vsel %vm41, %v19, 0
  %v46 = vsel %vm41, %v20, 0
  %48 = vmatpush.bf16.msra.mxu0 0
  %49 = vmatpush.bf16.msra.mxu0 0
  %50 = vmatpush.bf16.msra.mxu0 0
  %51 = vmatpush.bf16.msra.mxu0 0
  %52 = vmatpush.bf16.msra.mxu0 0
  %53 = vmatpush.bf16.msra.mxu0 0
  %54 = vmatpush.bf16.msra.mxu0 %v38
  %55 = vmatpush.bf16.msra.mxu0 %v37
  %56 = vmatmul.bf16.gmra.mxu0 %v43
  %v57 = vpop.f32.mrf.mxu0
  %v58 = vadd.f32 %v27, %v57
  %v59 = vpop.f32.mrf.mxu0
  %v60 = vadd.f32 %v27, %v59
  %61 = vmatmul.bf16.gmra.mxu0 %v46
  %v62 = vpop.f32.mrf.mxu0
  %v63 = vadd.f32 %v27, %v62
  %v64 = vpop.f32.mrf.mxu0
  %v65 = vadd.f32 %v27, %v64
  %66 = vdwg.mxu0
  %vm67 = vcmask 523264
  %68 = vst.msk [vmem:[%s3] sm:$0xff] %vm67, %v58
  %69 = vst.msk [vmem:[%s3 + $0x8] sm:$0xff] %vm67, %v60
  %70 = vst.msk [vmem:[%s3 + $0x10] sm:$0xff] %vm67, %v63
  %71 = vst.msk [vmem:[%s3 + $0x18] sm:$0xff] %vm67, %v65
  // Predicated region
  $region14: #{disentangled_transformer_block.5} parent=0 // pred_check
    _
  $region15: #{disentangled_transformer_block.5} parent=0 // pred_check_branch
    %73 = sbr.rel (0) target = $region17
  $region16: #{disentangled_transformer_block.5} parent=0 // pred_region
    _
  $region17: #{disentangled_transformer_block.5} parent=0 // pred_fallthru
    _
  // Predicated region
  $region18: #{disentangled_transformer_block.5} parent=0 // pred_check
    _
  $region19: #{disentangled_transformer_block.5} parent=0 // pred_check_branch
    %75 = sbr.rel (0) target = $region21
  $region20: #{disentangled_transformer_block.5} parent=0 // pred_region
    _
  $region21: #{disentangled_transformer_block.5} parent=0 // pred_fallthru
    _

// kernel: disentangled_transformer_block.4
$region0: #{disentangled_transformer_block.4}
  #allocation0 [shape = 'u32[]', space=smem, size = 0x4, offset = 0x4, fixed_abs, tag = 'smem constant byte address 0x4 - core index']
  #allocation1 [shape = 'u32[72,128]{1,0:T(1,128)}', space=vmem, size = 0x9000, scoped, tag = 'internal scratch']
  %s0 = inlined_call_operand.vmem [shape: f32[16,32], index: 0, kind: input, shape index: {}]
  %s1 = inlined_call_operand.vmem [shape: f32[1,32], index: 1, kind: input, shape index: {}]
  %s2 = inlined_call_operand.vmem [shape: f32[1,32], index: 2, kind: input, shape index: {}]
  %s3 = inlined_call_operand.vmem [shape: bf16[32,96], index: 3, kind: input, shape index: {}]
  %s4 = inlined_call_operand.vmem [shape: f32[1,96], index: 4, kind: input, shape index: {}]
  %s5 = inlined_call_operand.vmem [shape: bf16[16,96], index: 5, kind: output, shape index: {}]
  %s6 = sld [smem:[#allocation0]]
  $region30: #{disentangled_transformer_block.4} parent=0
    _
  %s8 = ssub.s32 1, %s6
  %s9 = scalar_select 0, %s8, %s6
  // Predicated region
  $region2: #{disentangled_transformer_block.4} parent=0 // pred_check
    _
  $region3: #{disentangled_transformer_block.4} parent=0 // pred_check_branch
    %11 = sbr.rel (0) target = $region5
  $region4: #{disentangled_transformer_block.4} parent=0 // pred_region
    _
  $region5: #{disentangled_transformer_block.4} parent=0 // pred_fallthru
    _
  // Predicated region
  $region6: #{disentangled_transformer_block.4} parent=0 // pred_check
    _
  $region7: #{disentangled_transformer_block.4} parent=0 // pred_check_branch
    %13 = sbr.rel (0) target = $region9
  $region8: #{disentangled_transformer_block.4} parent=0 // pred_region
    _
  $region9: #{disentangled_transformer_block.4} parent=0 // pred_fallthru
    _
  // Predicated region
  $region10: #{disentangled_transformer_block.4} parent=0 // pred_check
    _
  $region11: #{disentangled_transformer_block.4} parent=0 // pred_check_branch
    %15 = sbr.rel (0) target = $region13
  $region12: #{disentangled_transformer_block.4} parent=0 // pred_region
    _
  $region13: #{disentangled_transformer_block.4} parent=0 // pred_fallthru
    _
  // Predicated region
  $region14: #{disentangled_transformer_block.4} parent=0 // pred_check
    _
  $region15: #{disentangled_transformer_block.4} parent=0 // pred_check_branch
    %17 = sbr.rel (0) target = $region17
  $region16: #{disentangled_transformer_block.4} parent=0 // pred_region
    _
  $region17: #{disentangled_transformer_block.4} parent=0 // pred_fallthru
    _
  // Predicated region
  $region18: #{disentangled_transformer_block.4} parent=0 // pred_check
    _
  $region19: #{disentangled_transformer_block.4} parent=0 // pred_check_branch
    %19 = sbr.rel (0) target = $region21
  $region20: #{disentangled_transformer_block.4} parent=0 // pred_region
    _
  $region21: #{disentangled_transformer_block.4} parent=0 // pred_fallthru
    _
  %v21 = vld [vmem:[%s0] sm:$0xff]
  %v22 = vld [vmem:[%s0 + $0x8] sm:$0xff]
  %vm23 = vcmask 261120
  %v24 = vsel %vm23, %v21, 0.0
  %25 = vadd.xlane.f32.xlu0 %v24
  %v26 = vpop.xlane.xlu0 %25
  %v27 = vsel %vm23, %v22, 0.0
  %28 = vadd.xlane.f32.xlu0 %v27
  %v29 = vpop.xlane.xlu0 %28
  %v30 = vrcp.pop 32.0
  %v31 = vmul.f32 32.0, %v30
  %v32 = vsub.f32 1.0, %v31
  %v33 = vmul.f32 %v30, %v32
  %v34 = vadd.f32 %v30, %v33
  %vm35 = vweird.f32 %v30
  %v36 = vsel %vm35, %v30, %v34
  %v37 = vmul.f32 %v26, %v36
  %v38 = vmul.f32 %v29, %v36
  %v39 = vsub.f32 %v21, %v37
  %v40 = vsub.f32 %v22, %v38
  %v41 = vmul.f32 %v39, %v39
  %v42 = vmul.f32 %v40, %v40
  %v43 = vsel %vm23, %v41, 0.0
  %44 = vadd.xlane.f32.xlu0 %v43
  %v45 = vpop.xlane.xlu0 %44
  %v46 = vsel %vm23, %v42, 0.0
  %47 = vadd.xlane.f32.xlu0 %v46
  %v48 = vpop.xlane.xlu0 %47
  %v49 = vmul.f32 %v45, %v36
  %v50 = vmul.f32 %v48, %v36
  %v51 = vadd.f32 %v49, 1e-05
  %v52 = vadd.f32 %v50, 1e-05
  %v53 = vrsqrt.pop %v51
  %v54 = vmul.f32 %v53, %v51
  %v55 = vmul.f32 %v54, %v53
  %v56 = vmul.f32 0.5, %v55
  %v57 = vsub.f32 1.5, %v56
  %v58 = vmul.f32 %v53, %v57
  %vm59 = vweird.f32 %v51
  %vm60 = vweird.f32 %v53
  %vm61 = vmor %vm59, %vm60
  %v62 = vsel %vm61, %v53, %v58
  %v63 = vrsqrt.pop %v52
  %v64 = vmul.f32 %v63, %v52
  %v65 = vmul.f32 %v64, %v63
  %v66 = vmul.f32 0.5, %v65
  %v67 = vsub.f32 1.5, %v66
  %v68 = vmul.f32 %v63, %v67
  %vm69 = vweird.f32 %v52
  %vm70 = vweird.f32 %v63
  %vm71 = vmor %vm69, %vm70
  %v72 = vsel %vm71, %v63, %v68
  %v73 = vmul.f32 %v39, %v62
  %v74 = vmul.f32 %v40, %v72
  %v75 = vld [vmem:[%s1] sm:$0x1]
  %v77 = vperm.slane %v75, 0
  %v79 = vmul.f32 %v73, %v77
  %v80 = vmul.f32 %v74, %v77
  %v81 = vld [vmem:[%s2] sm:$0x1]
  %v83 = vperm.slane %v81, 0
  %v85 = vadd.f32 %v79, %v83
  %v86 = vadd.f32 %v80, %v83
  %v87 = vpack.c.bf16 %v86, %v85
  %v88 = vld [vmem:[%s3] sm:$0xf]
  %v89 = vld [vmem:[%s3 + $0x4] sm:$0xf]
  %v90 = vld [vmem:[%s3 + $0x8] sm:$0xf]
  %v91 = vld [vmem:[%s3 + $0xc] sm:$0xf]
  %v92 = vld [vmem:[%s4] sm:$0x1]
  %v94 = vperm.slane %v92, 0
  %v100 = vunpack.c.l.b16 %v88
  %v101 = vunpack.c.l.b16 %v89
  %v102 = vunpack.c.l.b16 %v90
  %v103 = vunpack.c.l.b16 %v91
  %v104 = vpack.c.b16 %v101, %v100
  %v105 = vpack.c.b16 %v103, %v102
  %v109 = vsel %vm23, %v87, 0
  %111 = vmatpush.bf16.msra.mxu0 0
  %112 = vmatpush.bf16.msra.mxu0 0
  %113 = vmatpush.bf16.msra.mxu0 0
  %114 = vmatpush.bf16.msra.mxu0 0
  %115 = vmatpush.bf16.msra.mxu0 0
  %116 = vmatpush.bf16.msra.mxu0 0
  %117 = vmatpush.bf16.msra.mxu0 %v105
  %118 = vmatpush.bf16.msra.mxu0 %v104
  %119 = vmatmul.bf16.gmra.mxu0 %v109
  %v120 = vpop.f32.mrf.mxu0
  %v121 = vadd.f32 %v94, %v120
  %v122 = vpop.f32.mrf.mxu0
  %v123 = vadd.f32 %v94, %v122
  %124 = vdwg.mxu0
  %v125 = vpack.c.bf16 %v121, %v121
  %v126 = vpack.c.bf16 %v123, %v123
  %vm127 = vcmask 781312
  %128 = vst.msk [vmem:[%s5] sm:$0xf] %vm127, %v125
  %129 = vst.msk [vmem:[%s5 + $0x4] sm:$0xf] %vm127, %v126
  // Predicated region
  $region22: #{disentangled_transformer_block.4} parent=0 // pred_check
    _
  $region23: #{disentangled_transformer_block.4} parent=0 // pred_check_branch
    %131 = sbr.rel (0) target = $region25
  $region24: #{disentangled_transformer_block.4} parent=0 // pred_region
    _
  $region25: #{disentangled_transformer_block.4} parent=0 // pred_fallthru
    _
  // Predicated region
  $region26: #{disentangled_transformer_block.4} parent=0 // pred_check
    _
  $region27: #{disentangled_transformer_block.4} parent=0 // pred_check_branch
    %133 = sbr.rel (0) target = $region29
  $region28: #{disentangled_transformer_block.4} parent=0 // pred_region
    _
  $region29: #{disentangled_transformer_block.4} parent=0 // pred_fallthru
    _

// kernel: disentangled_transformer_block.7
$region0: #{disentangled_transformer_block.7}
  #allocation0 [shape = 'u32[]', space=smem, size = 0x4, offset = 0x4, fixed_abs, tag = 'smem constant byte address 0x4 - core index']
  #allocation1 [shape = 'u32[72,128]{1,0:T(1,128)}', space=vmem, size = 0x9000, scoped, tag = 'internal scratch']
  %s0 = inlined_call_operand.vmem [shape: bf16[16,32], index: 0, kind: input, shape index: {}]
  %s1 = inlined_call_operand.vmem [shape: f32[16,32], index: 1, kind: input, shape index: {}]
  %s2 = inlined_call_operand.vmem [shape: bf16[32,32], index: 2, kind: input, shape index: {}]
  %s3 = inlined_call_operand.vmem [shape: f32[1,32], index: 3, kind: input, shape index: {}]
  %s4 = inlined_call_operand.vmem [shape: f32[1,32], index: 4, kind: input, shape index: {}]
  %s5 = inlined_call_operand.vmem [shape: f32[1,32], index: 5, kind: input, shape index: {}]
  %s6 = inlined_call_operand.vmem [shape: bf16[32,64], index: 6, kind: input, shape index: {}]
  %s7 = inlined_call_operand.vmem [shape: f32[1,64], index: 7, kind: input, shape index: {}]
  %s8 = inlined_call_operand.vmem [shape: bf16[64,32], index: 8, kind: input, shape index: {}]
  %s9 = inlined_call_operand.vmem [shape: f32[1,32], index: 9, kind: input, shape index: {}]
  %s10 = inlined_call_operand.hbm [shape: f32[16,32], index: 10, kind: output, shape index: {}]
  %s11 = sld [smem:[#allocation0]]
  $region50: #{disentangled_transformer_block.7} parent=0
    _
  %s13 = ssub.s32 1, %s11
  %s14 = scalar_select 0, %s13, %s11
  $region1: #{disentangled_transformer_block.7} parent=0
    #allocation2 [shape = 'u8[8192]{0}', space=vmem, size = 0x2000, scoped, tag = 'output window, operand 0, single buffered']
    #allocation3 [shape = 's32[1]{0}', space=sflag, size = 0x4, scoped, tag = 'scoped memory for disentangled_transformer_block.7']
    %15 = vsyncpa [#allocation3], 0
    // Predicated region
    $region2: #{disentangled_transformer_block.7} parent=1 // pred_check
      _
    $region3: #{disentangled_transformer_block.7} parent=1 // pred_check_branch
      %17 = sbr.rel (0) target = $region5
    $region4: #{disentangled_transformer_block.7} parent=1 // pred_region
      _
    $region5: #{disentangled_transformer_block.7} parent=1 // pred_fallthru
      _
    // Predicated region
    $region6: #{disentangled_transformer_block.7} parent=1 // pred_check
      _
    $region7: #{disentangled_transformer_block.7} parent=1 // pred_check_branch
      %19 = sbr.rel (0) target = $region9
    $region8: #{disentangled_transformer_block.7} parent=1 // pred_region
      _
    $region9: #{disentangled_transformer_block.7} parent=1 // pred_fallthru
      _
    // Predicated region
    $region10: #{disentangled_transformer_block.7} parent=1 // pred_check
      _
    $region11: #{disentangled_transformer_block.7} parent=1 // pred_check_branch
      %21 = sbr.rel (0) target = $region13
    $region12: #{disentangled_transformer_block.7} parent=1 // pred_region
      _
    $region13: #{disentangled_transformer_block.7} parent=1 // pred_fallthru
      _
    // Predicated region
    $region14: #{disentangled_transformer_block.7} parent=1 // pred_check
      _
    $region15: #{disentangled_transformer_block.7} parent=1 // pred_check_branch
      %23 = sbr.rel (0) target = $region17
    $region16: #{disentangled_transformer_block.7} parent=1 // pred_region
      _
    $region17: #{disentangled_transformer_block.7} parent=1 // pred_fallthru
      _
    // Predicated region
    $region18: #{disentangled_transformer_block.7} parent=1 // pred_check
      _
    $region19: #{disentangled_transformer_block.7} parent=1 // pred_check_branch
      %25 = sbr.rel (0) target = $region21
    $region20: #{disentangled_transformer_block.7} parent=1 // pred_region
      _
    $region21: #{disentangled_transformer_block.7} parent=1 // pred_fallthru
      _
    // Predicated region
    $region22: #{disentangled_transformer_block.7} parent=1 // pred_check
      _
    $region23: #{disentangled_transformer_block.7} parent=1 // pred_check_branch
      %27 = sbr.rel (0) target = $region25
    $region24: #{disentangled_transformer_block.7} parent=1 // pred_region
      _
    $region25: #{disentangled_transformer_block.7} parent=1 // pred_fallthru
      _
    // Predicated region
    $region26: #{disentangled_transformer_block.7} parent=1 // pred_check
      _
    $region27: #{disentangled_transformer_block.7} parent=1 // pred_check_branch
      %29 = sbr.rel (0) target = $region29
    $region28: #{disentangled_transformer_block.7} parent=1 // pred_region
      _
    $region29: #{disentangled_transformer_block.7} parent=1 // pred_fallthru
      _
    // Predicated region
    $region30: #{disentangled_transformer_block.7} parent=1 // pred_check
      _
    $region31: #{disentangled_transformer_block.7} parent=1 // pred_check_branch
      %31 = sbr.rel (0) target = $region33
    $region32: #{disentangled_transformer_block.7} parent=1 // pred_region
      _
    $region33: #{disentangled_transformer_block.7} parent=1 // pred_fallthru
      _
    // Predicated region
    $region34: #{disentangled_transformer_block.7} parent=1 // pred_check
      _
    $region35: #{disentangled_transformer_block.7} parent=1 // pred_check_branch
      %33 = sbr.rel (0) target = $region37
    $region36: #{disentangled_transformer_block.7} parent=1 // pred_region
      _
    $region37: #{disentangled_transformer_block.7} parent=1 // pred_fallthru
      _
    // Predicated region
    $region38: #{disentangled_transformer_block.7} parent=1 // pred_check
      _
    $region39: #{disentangled_transformer_block.7} parent=1 // pred_check_branch
      %35 = sbr.rel (0) target = $region41
    $region40: #{disentangled_transformer_block.7} parent=1 // pred_region
      _
    $region41: #{disentangled_transformer_block.7} parent=1 // pred_fallthru
      _
    %v37 = vld [vmem:[%s0] sm:$0xf]
    %v38 = vld [vmem:[%s0 + $0x4] sm:$0xf]
    %v39 = vld [vmem:[%s2] sm:$0xf]
    %v40 = vld [vmem:[%s2 + $0x4] sm:$0xf]
    %v41 = vld [vmem:[%s2 + $0x8] sm:$0xf]
    %v42 = vld [vmem:[%s2 + $0xc] sm:$0xf]
    %v43 = vld [vmem:[%s3] sm:$0x1]
    %v45 = vperm.slane %v43, 0
    %v49 = vunpack.c.l.b16 %v37
    %v50 = vunpack.c.l.b16 %v38
    %v51 = vpack.c.b16 %v50, %v49
    %v56 = vunpack.c.l.b16 %v39
    %v57 = vunpack.c.l.b16 %v40
    %v58 = vunpack.c.l.b16 %v41
    %v59 = vunpack.c.l.b16 %v42
    %v60 = vpack.c.b16 %v57, %v56
    %v61 = vpack.c.b16 %v59, %v58
    %vm64 = vcmask 261120
    %v66 = vsel %vm64, %v51, 0
    %68 = vmatpush.bf16.msra.mxu0 0
    %69 = vmatpush.bf16.msra.mxu0 0
    %70 = vmatpush.bf16.msra.mxu0 0
    %71 = vmatpush.bf16.msra.mxu0 0
    %72 = vmatpush.bf16.msra.mxu0 0
    %73 = vmatpush.bf16.msra.mxu0 0
    %74 = vmatpush.bf16.msra.mxu0 %v61
    %75 = vmatpush.bf16.msra.mxu0 %v60
    %76 = vmatmul.bf16.gmra.mxu0 %v66
    %v77 = vpop.f32.mrf.mxu0
    %v78 = vadd.f32 %v45, %v77
    %v79 = vpop.f32.mrf.mxu0
    %v80 = vadd.f32 %v45, %v79
    %81 = vdwg.mxu0
    %v82 = vld [vmem:[%s1] sm:$0xff]
    %v83 = vld [vmem:[%s1 + $0x8] sm:$0xff]
    %v84 = vadd.f32 %v82, %v78
    %v85 = vadd.f32 %v83, %v80
    %v86 = vsel %vm64, %v84, 0.0
    %87 = vadd.xlane.f32.xlu0 %v86
    %v88 = vpop.xlane.xlu0 %87
    %v89 = vsel %vm64, %v85, 0.0
    %90 = vadd.xlane.f32.xlu0 %v89
    %v91 = vpop.xlane.xlu0 %90
    %v92 = vrcp.pop 32.0
    %v93 = vmul.f32 32.0, %v92
    %v94 = vsub.f32 1.0, %v93
    %v95 = vmul.f32 %v92, %v94
    %v96 = vadd.f32 %v92, %v95
    %vm97 = vweird.f32 %v92
    %v98 = vsel %vm97, %v92, %v96
    %v99 = vmul.f32 %v88, %v98
    %v100 = vmul.f32 %v91, %v98
    %v101 = vsub.f32 %v84, %v99
    %v102 = vsub.f32 %v85, %v100
    %v103 = vmul.f32 %v101, %v101
    %v104 = vmul.f32 %v102, %v102
    %v105 = vsel %vm64, %v103, 0.0
    %106 = vadd.xlane.f32.xlu0 %v105
    %v107 = vpop.xlane.xlu0 %106
    %v108 = vsel %vm64, %v104, 0.0
    %109 = vadd.xlane.f32.xlu0 %v108
    %v110 = vpop.xlane.xlu0 %109
    %v111 = vmul.f32 %v107, %v98
    %v112 = vmul.f32 %v110, %v98
    %v113 = vadd.f32 %v111, 1e-05
    %v114 = vadd.f32 %v112, 1e-05
    %v115 = vrsqrt.pop %v113
    %v116 = vmul.f32 %v115, %v113
    %v117 = vmul.f32 %v116, %v115
    %v118 = vmul.f32 0.5, %v117
    %v119 = vsub.f32 1.5, %v118
    %v120 = vmul.f32 %v115, %v119
    %vm121 = vweird.f32 %v113
    %vm122 = vweird.f32 %v115
    %vm123 = vmor %vm121, %vm122
    %v124 = vsel %vm123, %v115, %v120
    %v125 = vrsqrt.pop %v114
    %v126 = vmul.f32 %v125, %v114
    %v127 = vmul.f32 %v126, %v125
    %v128 = vmul.f32 0.5, %v127
    %v129 = vsub.f32 1.5, %v128
    %v130 = vmul.f32 %v125, %v129
    %vm131 = vweird.f32 %v114
    %vm132 = vweird.f32 %v125
    %vm133 = vmor %vm131, %vm132
    %v134 = vsel %vm133, %v125, %v130
    %v135 = vmul.f32 %v101, %v124
    %v136 = vmul.f32 %v102, %v134
    %v137 = vld [vmem:[%s4] sm:$0x1]
    %v139 = vperm.slane %v137, 0
    %v141 = vmul.f32 %v135, %v139
    %v142 = vmul.f32 %v136, %v139
    %v143 = vld [vmem:[%s5] sm:$0x1]
    %v145 = vperm.slane %v143, 0
    %v147 = vadd.f32 %v141, %v145
    %v148 = vadd.f32 %v142, %v145
    %v149 = vpack.c.bf16 %v148, %v147
    %v150 = vld [vmem:[%s6] sm:$0xf]
    %v151 = vld [vmem:[%s6 + $0x4] sm:$0xf]
    %v152 = vld [vmem:[%s6 + $0x8] sm:$0xf]
    %v153 = vld [vmem:[%s6 + $0xc] sm:$0xf]
    %v154 = vld [vmem:[%s7] sm:$0x1]
    %v156 = vperm.slane %v154, 0
    %v162 = vunpack.c.l.b16 %v150
    %v163 = vunpack.c.l.b16 %v151
    %v164 = vunpack.c.l.b16 %v152
    %v165 = vunpack.c.l.b16 %v153
    %v166 = vpack.c.b16 %v163, %v162
    %v167 = vpack.c.b16 %v165, %v164
    %v171 = vsel %vm64, %v149, 0
    %173 = vmatpush.bf16.msra.mxu0 0
    %174 = vmatpush.bf16.msra.mxu0 0
    %175 = vmatpush.bf16.msra.mxu0 0
    %176 = vmatpush.bf16.msra.mxu0 0
    %177 = vmatpush.bf16.msra.mxu0 0
    %178 = vmatpush.bf16.msra.mxu0 0
    %179 = vmatpush.bf16.msra.mxu0 %v167
    %180 = vmatpush.bf16.msra.mxu0 %v166
    %181 = vmatmul.bf16.gmra.mxu0 %v171
    %v182 = vpop.f32.mrf.mxu0
    %v183 = vadd.f32 %v156, %v182
    %v184 = vpop.f32.mrf.mxu0
    %v185 = vadd.f32 %v156, %v184
    %186 = vdwg.mxu0
    %v187 = vmax.f32 %v183, 0.0
    %v188 = vmax.f32 %v185, 0.0
    %v189 = vpack.c.bf16 %v188, %v187
    %v190 = vld [vmem:[%s8] sm:$0xf]
    %v191 = vld [vmem:[%s8 + $0x4] sm:$0xf]
    %v192 = vld [vmem:[%s8 + $0x8] sm:$0xf]
    %v193 = vld [vmem:[%s8 + $0xc] sm:$0xf]
    %v194 = vld [vmem:[%s8 + $0x10] sm:$0xf]
    %v195 = vld [vmem:[%s8 + $0x14] sm:$0xf]
    %v196 = vld [vmem:[%s8 + $0x18] sm:$0xf]
    %v197 = vld [vmem:[%s8 + $0x1c] sm:$0xf]
    %v198 = vld [vmem:[%s9] sm:$0x1]
    %v200 = vperm.slane %v198, 0
    %v210 = vunpack.c.l.b16 %v190
    %v211 = vunpack.c.l.b16 %v191
    %v212 = vunpack.c.l.b16 %v192
    %v213 = vunpack.c.l.b16 %v193
    %v214 = vunpack.c.l.b16 %v194
    %v215 = vunpack.c.l.b16 %v195
    %v216 = vunpack.c.l.b16 %v196
    %v217 = vunpack.c.l.b16 %v197
    %v218 = vpack.c.b16 %v211, %v210
    %v219 = vpack.c.b16 %v213, %v212
    %v220 = vpack.c.b16 %v215, %v214
    %v221 = vpack.c.b16 %v217, %v216
    %vm226 = vcmask 523264
    %v228 = vsel %vm226, %v189, 0
    %230 = vmatpush.bf16.msra.mxu0 0
    %231 = vmatpush.bf16.msra.mxu0 0
    %232 = vmatpush.bf16.msra.mxu0 0
    %233 = vmatpush.bf16.msra.mxu0 0
    %234 = vmatpush.bf16.msra.mxu0 %v221
    %235 = vmatpush.bf16.msra.mxu0 %v220
    %236 = vmatpush.bf16.msra.mxu0 %v219
    %237 = vmatpush.bf16.msra.mxu0 %v218
    %238 = vmatmul.bf16.gmra.mxu0 %v228
    %v239 = vpop.f32.mrf.mxu0
    %v240 = vadd.f32 %v200, %v239
    %v241 = vpop.f32.mrf.mxu0
    %v242 = vadd.f32 %v200, %v241
    %243 = vdwg.mxu0
    %v244 = vadd.f32 %v84, %v240
    %v245 = vadd.f32 %v85, %v242
    %246 = vst.msk [vmem:[#allocation2] sm:$0xff] %vm64, %v244
    %247 = vst.msk [vmem:[#allocation2 + $0x8] sm:$0xff] %vm64, %v245
    // Predicated region
    $region42: #{disentangled_transformer_block.7} parent=1 // pred_check
      _
    $region43: #{disentangled_transformer_block.7} parent=1 // pred_check_branch
      %249 = sbr.rel (0) target = $region45
    $region44: #{disentangled_transformer_block.7} parent=1 // pred_region
      %251 = vsyncadd [#allocation3], 0
      %s252 = sshll.u32 [#allocation2], 4
      %s253 = int_to_ptr.vmem [resolvable:$true] %s252
      %s254 = sshll.u32 %s10, 4
      %s255 = int_to_ptr.hbm [resolvable:$true] %s254
      %260 = dma.vmem_to_hbm [thread:$0]  %s253, 256, %s255, [#allocation3], 128, 128, 8
    $region45: #{disentangled_transformer_block.7} parent=1 // pred_fallthru
      _
    // Predicated region
    $region46: #{disentangled_transformer_block.7} parent=1 // pred_check
      _
    $region47: #{disentangled_transformer_block.7} parent=1 // pred_check_branch
      %262 = sbr.rel (0) target = $region49
    $region48: #{disentangled_transformer_block.7} parent=1 // pred_region
      %264 = dma.done [#allocation3], 256
    $region49: #{disentangled_transformer_block.7} parent=1 // pred_fallthru
      _
    %265 = vsyncpa [#allocation3], 1

// kernel: disentangled_transformer_block.6
$region0: #{disentangled_transformer_block.6}
  #allocation0 [shape = 'u32[]', space=smem, size = 0x4, offset = 0x4, fixed_abs, tag = 'smem constant byte address 0x4 - core index']
  #allocation1 [shape = 'u32[72,128]{1,0:T(1,128)}', space=vmem, size = 0x9000, scoped, tag = 'internal scratch']
  #allocation2 [shape = 'f32[8,1]{1,0:T(8,128)}', space=vmem, size = 0x1000, scoped, tag = 'scratch operand']
  #allocation3 [shape = 'f32[8,1]{1,0:T(8,128)}', space=vmem, size = 0x1000, scoped, tag = 'scratch operand']
  #allocation4 [shape = 'f32[8,8]{1,0:T(8,128)}', space=vmem, size = 0x1000, scoped, tag = 'scratch operand']
  %s0 = inlined_call_operand.vmem [shape: bf16[2,4,8,8], index: 0, kind: input, shape index: {}]
  %s1 = inlined_call_operand.vmem [shape: bf16[2,4,8,8], index: 1, kind: input, shape index: {}, may-alias: {1,2}]
  %s2 = inlined_call_operand.vmem [shape: bf16[2,4,8,8], index: 2, kind: input, shape index: {}, may-alias: {1,2}]
  %s3 = inlined_call_operand.vmem [shape: bf16[2,4,8,8], index: 3, kind: input, shape index: {}]
  %s4 = inlined_call_operand.vmem [shape: bf16[4,2,8,8], index: 4, kind: input, shape index: {}, may-alias: {4,5}]
  %s5 = inlined_call_operand.vmem [shape: bf16[4,2,8,8], index: 5, kind: input, shape index: {}, may-alias: {4,5}]
  %s6 = inlined_call_operand.vmem [shape: bf16[4,2,8,8], index: 6, kind: input, shape index: {}, may-alias: {6,7}]
  %s7 = inlined_call_operand.vmem [shape: bf16[4,2,8,8], index: 7, kind: input, shape index: {}, may-alias: {6,7}]
  %s8 = inlined_call_operand.vmem [shape: bf16[2,4,8,8], index: 8, kind: output, shape index: {}]
  %s9 = sld [smem:[#allocation0]]
  $region73: #{disentangled_transformer_block.6} parent=0
    _
  %s11 = ssub.s32 1, %s9
  %s12 = scalar_select 0, %s11, %s9
  loop: start=0, step=1, limit=10
  $region2: #{disentangled_transformer_block.6} parent=0 // loop_pre_header
    _
  $region3: #{disentangled_transformer_block.6} parent=0 // loop_header
    %s14 = sphi 0, %s18
    %p15 = scmp.ge.s32.totalorder %s14, 10
    %s21 = sphi 0, %s47
    %s22 = sphi 0, %s43
    %s23 = sphi 0, %s39
    %s24 = sphi 0, %s35
    %s25 = sphi 0, %s21
    %s26 = sphi 0, %s22
    %s27 = sphi 0, %s23
    %s28 = sphi 0, %s24
    %s29 = sphi 0, %s25
    %s30 = sphi 0, %s26
    %s31 = sphi 0, %s27
    %s32 = sphi 0, %s28
    %s54 = sphi 0, %s56
    %s57 = sphi 0, %s54
    %s58 = sphi 0, %s57
    %s74 = sphi 0, %s58
    %s84 = sphi 0, %s86
    %s87 = sphi 0, %s84
    %s88 = sphi 0, %s87
    %s104 = sphi 0, %s88
    %s114 = sphi 0, %s116
    %s117 = sphi 0, %s114
    %s118 = sphi 0, %s117
    %s134 = sphi 0, %s118
    %s144 = sphi 0, %s146
    %s147 = sphi 0, %s144
    %s148 = sphi 0, %s147
    %s164 = sphi 0, %s148
    %s174 = sphi 0, %s176
    %s177 = sphi 0, %s174
    %s178 = sphi 0, %s177
    %s194 = sphi 0, %s178
    %s206 = sphi 0, %s208
    %s209 = sphi 0, %s206
    %s210 = sphi 0, %s209
    %s226 = sphi 0, %s210
    %s236 = sphi 0, %s238
    %s239 = sphi 0, %s236
    %s240 = sphi 0, %s239
    %s256 = sphi 0, %s240
    %s268 = sphi 0, %s270
    %s271 = sphi 0, %s268
    %s272 = sphi 0, %s271
    %s288 = sphi 0, %s272
    %s298 = sphi 0, %s300
    %s301 = sphi 0, %s298
    %s302 = sphi 0, %s301
    %s318 = sphi 0, %s302
  $region4: #{disentangled_transformer_block.6} parent=0 // loop_header_branch
    %17 = sbr.rel (%p15) target = $region8
  $region5: #{disentangled_transformer_block.6} parent=0 // loop_body
    %s19 = ssub.s32 %s14, 1
    %s20 = ssub.s32 %s14, 2
    %s33 = sadd.s32 1, %s24
    %p34 = scmp.ge.s32.totalorder %s33, 1
    %s35 = scalar_select %p34, 0, %s33
    %s36 = sadd.s32 1, %s23
    %s37 = scalar_select %p34, %s36, %s23
    %p38 = scmp.ge.s32.totalorder %s37, 1
    %s39 = scalar_select %p38, 0, %s37
    %s40 = sadd.s32 1, %s22
    %s41 = scalar_select %p38, %s40, %s22
    %p42 = scmp.ge.s32.totalorder %s41, 4
    %s43 = scalar_select %p42, 0, %s41
    %s44 = sadd.s32 1, %s21
    %s45 = scalar_select %p42, %s44, %s21
    %p46 = scmp.ge.s32.totalorder %s45, 2
    %s47 = scalar_select %p46, 0, %s45
    %s48 = ssub.s32 %s21, %s47
    %s49 = ssub.s32 %s22, %s43
    %s50 = sor.u32 %s48, %s49
    %s51 = ssub.s32 %s23, %s39
    %s52 = sor.u32 %s50, %s51
    %p53 = scmp.eq.s32.totalorder %s52, 0
    %s55 = sadd.s32 %s54, 1
    %s56 = scalar_select %p53, %s54, %s55
    %p59 = pneg %p53
    %p60 = scmp.eq.s32.totalorder %s14, 7
    %p61 = por %p59, %p60
    %p62 = scmp.ne.s32.totalorder %s54, %s57
    %p63 = scmp.eq.s32.totalorder %s14, 0
    %p64 = por %p62, %p63
    %p65 = scmp.ne.s32.totalorder %s54, %s57
    %p66 = scmp.eq.s32.totalorder %s19, 7
    %p67 = por %p65, %p66
    %p68 = scmp.ne.s32.totalorder %s57, %s58
    %p69 = scmp.eq.s32.totalorder %s19, 0
    %p70 = por %p68, %p69
    %p71 = scmp.ne.s32.totalorder %s57, %s58
    %p72 = scmp.eq.s32.totalorder %s20, 7
    %p73 = por %p71, %p72
    %p75 = scmp.ne.s32.totalorder %s58, %s74
    %p76 = scmp.eq.s32.totalorder %s20, 0
    %p77 = por %p75, %p76
    %s78 = ssub.s32 %s21, %s47
    %s79 = ssub.s32 %s22, %s43
    %s80 = sor.u32 %s78, %s79
    %s81 = ssub.s32 %s23, %s39
    %s82 = sor.u32 %s80, %s81
    %p83 = scmp.eq.s32.totalorder %s82, 0
    %s85 = sadd.s32 %s84, 1
    %s86 = scalar_select %p83, %s84, %s85
    %p89 = pneg %p83
    %p90 = scmp.eq.s32.totalorder %s14, 7
    %p91 = por %p89, %p90
    %p92 = scmp.ne.s32.totalorder %s84, %s87
    %p93 = scmp.eq.s32.totalorder %s14, 0
    %p94 = por %p92, %p93
    %p95 = scmp.ne.s32.totalorder %s84, %s87
    %p96 = scmp.eq.s32.totalorder %s19, 7
    %p97 = por %p95, %p96
    %p98 = scmp.ne.s32.totalorder %s87, %s88
    %p99 = scmp.eq.s32.totalorder %s19, 0
    %p100 = por %p98, %p99
    %p101 = scmp.ne.s32.totalorder %s87, %s88
    %p102 = scmp.eq.s32.totalorder %s20, 7
    %p103 = por %p101, %p102
    %p105 = scmp.ne.s32.totalorder %s88, %s104
    %p106 = scmp.eq.s32.totalorder %s20, 0
    %p107 = por %p105, %p106
    %s108 = ssub.s32 %s21, %s47
    %s109 = ssub.s32 %s22, %s43
    %s110 = sor.u32 %s108, %s109
    %s111 = ssub.s32 %s24, %s35
    %s112 = sor.u32 %s110, %s111
    %p113 = scmp.eq.s32.totalorder %s112, 0
    %s115 = sadd.s32 %s114, 1
    %s116 = scalar_select %p113, %s114, %s115
    %p119 = pneg %p113
    %p120 = scmp.eq.s32.totalorder %s14, 7
    %p121 = por %p119, %p120
    %p122 = scmp.ne.s32.totalorder %s114, %s117
    %p123 = scmp.eq.s32.totalorder %s14, 0
    %p124 = por %p122, %p123
    %p125 = scmp.ne.s32.totalorder %s114, %s117
    %p126 = scmp.eq.s32.totalorder %s19, 7
    %p127 = por %p125, %p126
    %p128 = scmp.ne.s32.totalorder %s117, %s118
    %p129 = scmp.eq.s32.totalorder %s19, 0
    %p130 = por %p128, %p129
    %p131 = scmp.ne.s32.totalorder %s117, %s118
    %p132 = scmp.eq.s32.totalorder %s20, 7
    %p133 = por %p131, %p132
    %p135 = scmp.ne.s32.totalorder %s118, %s134
    %p136 = scmp.eq.s32.totalorder %s20, 0
    %p137 = por %p135, %p136
    %s138 = ssub.s32 %s21, %s47
    %s139 = ssub.s32 %s22, %s43
    %s140 = sor.u32 %s138, %s139
    %s141 = ssub.s32 %s24, %s35
    %s142 = sor.u32 %s140, %s141
    %p143 = scmp.eq.s32.totalorder %s142, 0
    %s145 = sadd.s32 %s144, 1
    %s146 = scalar_select %p143, %s144, %s145
    %p149 = pneg %p143
    %p150 = scmp.eq.s32.totalorder %s14, 7
    %p151 = por %p149, %p150
    %p152 = scmp.ne.s32.totalorder %s144, %s147
    %p153 = scmp.eq.s32.totalorder %s14, 0
    %p154 = por %p152, %p153
    %p155 = scmp.ne.s32.totalorder %s144, %s147
    %p156 = scmp.eq.s32.totalorder %s19, 7
    %p157 = por %p155, %p156
    %p158 = scmp.ne.s32.totalorder %s147, %s148
    %p159 = scmp.eq.s32.totalorder %s19, 0
    %p160 = por %p158, %p159
    %p161 = scmp.ne.s32.totalorder %s147, %s148
    %p162 = scmp.eq.s32.totalorder %s20, 7
    %p163 = por %p161, %p162
    %p165 = scmp.ne.s32.totalorder %s148, %s164
    %p166 = scmp.eq.s32.totalorder %s20, 0
    %p167 = por %p165, %p166
    %s168 = ssub.s32 %s24, %s23
    %s169 = ssub.s32 %s35, %s39
    %s170 = ssub.s32 %s22, %s43
    %s171 = ssub.s32 %s168, %s169
    %s172 = sor.u32 %s170, %s171
    %p173 = scmp.eq.s32.totalorder %s172, 0
    %s175 = sadd.s32 %s174, 1
    %s176 = scalar_select %p173, %s174, %s175
    %p179 = pneg %p173
    %p180 = scmp.eq.s32.totalorder %s14, 7
    %p181 = por %p179, %p180
    %p182 = scmp.ne.s32.totalorder %s174, %s177
    %p183 = scmp.eq.s32.totalorder %s14, 0
    %p184 = por %p182, %p183
    %p185 = scmp.ne.s32.totalorder %s174, %s177
    %p186 = scmp.eq.s32.totalorder %s19, 7
    %p187 = por %p185, %p186
    %p188 = scmp.ne.s32.totalorder %s177, %s178
    %p189 = scmp.eq.s32.totalorder %s19, 0
    %p190 = por %p188, %p189
    %p191 = scmp.ne.s32.totalorder %s177, %s178
    %p192 = scmp.eq.s32.totalorder %s20, 7
    %p193 = por %p191, %p192
    %p195 = scmp.ne.s32.totalorder %s178, %s194
    %p196 = scmp.eq.s32.totalorder %s20, 0
    %p197 = por %p195, %p196
    %s198 = ssub.s32 %s24, %s23
    %s199 = sadd.s32 %s198, 1
    %s200 = ssub.s32 %s35, %s39
    %s201 = sadd.s32 %s200, 1
    %s202 = ssub.s32 %s22, %s43
    %s203 = ssub.s32 %s199, %s201
    %s204 = sor.u32 %s202, %s203
    %p205 = scmp.eq.s32.totalorder %s204, 0
    %s207 = sadd.s32 %s206, 1
    %s208 = scalar_select %p205, %s206, %s207
    %p211 = pneg %p205
    %p212 = scmp.eq.s32.totalorder %s14, 7
    %p213 = por %p211, %p212
    %p214 = scmp.ne.s32.totalorder %s206, %s209
    %p215 = scmp.eq.s32.totalorder %s14, 0
    %p216 = por %p214, %p215
    %p217 = scmp.ne.s32.totalorder %s206, %s209
    %p218 = scmp.eq.s32.totalorder %s19, 7
    %p219 = por %p217, %p218
    %p220 = scmp.ne.s32.totalorder %s209, %s210
    %p221 = scmp.eq.s32.totalorder %s19, 0
    %p222 = por %p220, %p221
    %p223 = scmp.ne.s32.totalorder %s209, %s210
    %p224 = scmp.eq.s32.totalorder %s20, 7
    %p225 = por %p223, %p224
    %p227 = scmp.ne.s32.totalorder %s210, %s226
    %p228 = scmp.eq.s32.totalorder %s20, 0
    %p229 = por %p227, %p228
    %s230 = ssub.s32 %s24, %s23
    %s231 = ssub.s32 %s35, %s39
    %s232 = ssub.s32 %s22, %s43
    %s233 = ssub.s32 %s230, %s231
    %s234 = sor.u32 %s232, %s233
    %p235 = scmp.eq.s32.totalorder %s234, 0
    %s237 = sadd.s32 %s236, 1
    %s238 = scalar_select %p235, %s236, %s237
    %p241 = pneg %p235
    %p242 = scmp.eq.s32.totalorder %s14, 7
    %p243 = por %p241, %p242
    %p244 = scmp.ne.s32.totalorder %s236, %s239
    %p245 = scmp.eq.s32.totalorder %s14, 0
    %p246 = por %p244, %p245
    %p247 = scmp.ne.s32.totalorder %s236, %s239
    %p248 = scmp.eq.s32.totalorder %s19, 7
    %p249 = por %p247, %p248
    %p250 = scmp.ne.s32.totalorder %s239, %s240
    %p251 = scmp.eq.s32.totalorder %s19, 0
    %p252 = por %p250, %p251
    %p253 = scmp.ne.s32.totalorder %s239, %s240
    %p254 = scmp.eq.s32.totalorder %s20, 7
    %p255 = por %p253, %p254
    %p257 = scmp.ne.s32.totalorder %s240, %s256
    %p258 = scmp.eq.s32.totalorder %s20, 0
    %p259 = por %p257, %p258
    %s260 = ssub.s32 %s24, %s23
    %s261 = sadd.s32 %s260, 1
    %s262 = ssub.s32 %s35, %s39
    %s263 = sadd.s32 %s262, 1
    %s264 = ssub.s32 %s22, %s43
    %s265 = ssub.s32 %s261, %s263
    %s266 = sor.u32 %s264, %s265
    %p267 = scmp.eq.s32.totalorder %s266, 0
    %s269 = sadd.s32 %s268, 1
    %s270 = scalar_select %p267, %s268, %s269
    %p273 = pneg %p267
    %p274 = scmp.eq.s32.totalorder %s14, 7
    %p275 = por %p273, %p274
    %p276 = scmp.ne.s32.totalorder %s268, %s271
    %p277 = scmp.eq.s32.totalorder %s14, 0
    %p278 = por %p276, %p277
    %p279 = scmp.ne.s32.totalorder %s268, %s271
    %p280 = scmp.eq.s32.totalorder %s19, 7
    %p281 = por %p279, %p280
    %p282 = scmp.ne.s32.totalorder %s271, %s272
    %p283 = scmp.eq.s32.totalorder %s19, 0
    %p284 = por %p282, %p283
    %p285 = scmp.ne.s32.totalorder %s271, %s272
    %p286 = scmp.eq.s32.totalorder %s20, 7
    %p287 = por %p285, %p286
    %p289 = scmp.ne.s32.totalorder %s272, %s288
    %p290 = scmp.eq.s32.totalorder %s20, 0
    %p291 = por %p289, %p290
    %s292 = ssub.s32 %s21, %s47
    %s293 = ssub.s32 %s22, %s43
    %s294 = sor.u32 %s292, %s293
    %s295 = ssub.s32 %s23, %s39
    %s296 = sor.u32 %s294, %s295
    %p297 = scmp.eq.s32.totalorder %s296, 0
    %s299 = sadd.s32 %s298, 1
    %s300 = scalar_select %p297, %s298, %s299
    %p303 = pneg %p297
    %p304 = scmp.eq.s32.totalorder %s14, 7
    %p305 = por %p303, %p304
    %p306 = scmp.ne.s32.totalorder %s298, %s301
    %p307 = scmp.eq.s32.totalorder %s14, 0
    %p308 = por %p306, %p307
    %p309 = scmp.ne.s32.totalorder %s298, %s301
    %p310 = scmp.eq.s32.totalorder %s19, 7
    %p311 = por %p309, %p310
    %p312 = scmp.ne.s32.totalorder %s301, %s302
    %p313 = scmp.eq.s32.totalorder %s19, 0
    %p314 = por %p312, %p313
    %p315 = scmp.ne.s32.totalorder %s301, %s302
    %p316 = scmp.eq.s32.totalorder %s20, 7
    %p317 = por %p315, %p316
    %p319 = scmp.ne.s32.totalorder %s302, %s318
    %p320 = scmp.eq.s32.totalorder %s20, 0
    %p321 = por %p319, %p320
    %p322 = scmp.le.s32.totalorder 1, %s14
    %p323 = scmp.lt.s32.totalorder %s14, 9
    %p324 = pnand %p322, %p323
    %p325 = pneg %p324
    // Predicated region
    $region9: #{disentangled_transformer_block.6} parent=5 // pred_check
      _
    $region10: #{disentangled_transformer_block.6} parent=5 // pred_check_branch
      %327 = sbr.rel (%p324) target = $region12
    $region11: #{disentangled_transformer_block.6} parent=5 // pred_region
      %s328 = ssub.s32 %s14, 1
    $region12: #{disentangled_transformer_block.6} parent=5 // pred_fallthru
      _
    %p329 = scmp.lt.s32.totalorder %s14, 8
    // Predicated region
    $region13: #{disentangled_transformer_block.6} parent=5 // pred_check
      %p330 = pneg %p329
    $region14: #{disentangled_transformer_block.6} parent=5 // pred_check_branch
      %332 = sbr.rel (%p330) target = $region16
    $region15: #{disentangled_transformer_block.6} parent=5 // pred_region
      // Predicated region
      $region17: #{disentangled_transformer_block.6} parent=15 // pred_check
        %p333 = pneg %p64
      $region18: #{disentangled_transformer_block.6} parent=15 // pred_check_branch
        %335 = sbr.rel (%p333) target = $region20
      $region19: #{disentangled_transformer_block.6} parent=15 // pred_region
        %p336 = scmp.lt.s32.totalorder %s21, 1
        %s337 = scalar_select %p336, %s21, 1
        %p338 = scmp.lt.s32.totalorder %s22, 3
        %s339 = scalar_select %p338, %s22, 3
        %p340 = scmp.lt.s32.totalorder %s23, 0
        %s341 = scalar_select %p340, %s23, 0
        %s342 = sadd.s32 %s341, %s339
        %s343 = smul.addr %s337, 4
        %s344 = sadd.s32 %s342, %s343
        %s345 = smul.addr %s344, 4
        %s346 = scalar_lea.vmem %s0, %s345
      $region20: #{disentangled_transformer_block.6} parent=15 // pred_fallthru
        _
      // Predicated region
      $region21: #{disentangled_transformer_block.6} parent=15 // pred_check
        %p347 = pneg %p94
      $region22: #{disentangled_transformer_block.6} parent=15 // pred_check_branch
        %349 = sbr.rel (%p347) target = $region24
      $region23: #{disentangled_transformer_block.6} parent=15 // pred_region
        %p350 = scmp.lt.s32.totalorder %s21, 1
        %s351 = scalar_select %p350, %s21, 1
        %p352 = scmp.lt.s32.totalorder %s22, 3
        %s353 = scalar_select %p352, %s22, 3
        %p354 = scmp.lt.s32.totalorder %s23, 0
        %s355 = scalar_select %p354, %s23, 0
        %s356 = sadd.s32 %s355, %s353
        %s357 = smul.addr %s351, 4
        %s358 = sadd.s32 %s356, %s357
        %s359 = smul.addr %s358, 4
        %s360 = scalar_lea.vmem %s1, %s359
      $region24: #{disentangled_transformer_block.6} parent=15 // pred_fallthru
        _
      // Predicated region
      $region25: #{disentangled_transformer_block.6} parent=15 // pred_check
        %p361 = pneg %p124
      $region26: #{disentangled_transformer_block.6} parent=15 // pred_check_branch
        %363 = sbr.rel (%p361) target = $region28
      $region27: #{disentangled_transformer_block.6} parent=15 // pred_region
        %p364 = scmp.lt.s32.totalorder %s21, 1
        %s365 = scalar_select %p364, %s21, 1
        %p366 = scmp.lt.s32.totalorder %s22, 3
        %s367 = scalar_select %p366, %s22, 3
        %p368 = scmp.lt.s32.totalorder %s24, 0
        %s369 = scalar_select %p368, %s24, 0
        %s370 = sadd.s32 %s369, %s367
        %s371 = smul.addr %s365, 4
        %s372 = sadd.s32 %s370, %s371
        %s373 = smul.addr %s372, 4
        %s374 = scalar_lea.vmem %s2, %s373
      $region28: #{disentangled_transformer_block.6} parent=15 // pred_fallthru
        _
      // Predicated region
      $region29: #{disentangled_transformer_block.6} parent=15 // pred_check
        %p375 = pneg %p154
      $region30: #{disentangled_transformer_block.6} parent=15 // pred_check_branch
        %377 = sbr.rel (%p375) target = $region32
      $region31: #{disentangled_transformer_block.6} parent=15 // pred_region
        %p378 = scmp.lt.s32.totalorder %s21, 1
        %s379 = scalar_select %p378, %s21, 1
        %p380 = scmp.lt.s32.totalorder %s22, 3
        %s381 = scalar_select %p380, %s22, 3
        %p382 = scmp.lt.s32.totalorder %s24, 0
        %s383 = scalar_select %p382, %s24, 0
        %s384 = sadd.s32 %s383, %s381
        %s385 = smul.addr %s379, 4
        %s386 = sadd.s32 %s384, %s385
        %s387 = smul.addr %s386, 4
        %s388 = scalar_lea.vmem %s3, %s387
      $region32: #{disentangled_transformer_block.6} parent=15 // pred_fallthru
        _
      // Predicated region
      $region33: #{disentangled_transformer_block.6} parent=15 // pred_check
        %p389 = pneg %p184
      $region34: #{disentangled_transformer_block.6} parent=15 // pred_check_branch
        %391 = sbr.rel (%p389) target = $region36
      $region35: #{disentangled_transformer_block.6} parent=15 // pred_region
        %s392 = ssub.s32 %s24, %s23
        %p393 = scmp.lt.s32.totalorder %s22, 3
        %s394 = scalar_select %p393, %s22, 3
        %p395 = scmp.lt.s32.totalorder %s392, 1
        %s396 = scalar_select %p395, %s392, 1
        %s397 = smul.addr %s394, 2
        %s398 = sadd.s32 %s396, %s397
        %s399 = smul.addr %s398, 4
        %s400 = scalar_lea.vmem %s4, %s399
        %s401 = ssub.s32 %s24, %s23
      $region36: #{disentangled_transformer_block.6} parent=15 // pred_fallthru
        _
      // Predicated region
      $region37: #{disentangled_transformer_block.6} parent=15 // pred_check
        %p402 = pneg %p216
      $region38: #{disentangled_transformer_block.6} parent=15 // pred_check_branch
        %404 = sbr.rel (%p402) target = $region40
      $region39: #{disentangled_transformer_block.6} parent=15 // pred_region
        %s405 = ssub.s32 %s24, %s23
        %s406 = sadd.s32 %s405, 1
        %p407 = scmp.lt.s32.totalorder %s22, 3
        %s408 = scalar_select %p407, %s22, 3
        %p409 = scmp.lt.s32.totalorder %s406, 1
        %s410 = scalar_select %p409, %s406, 1
        %s411 = smul.addr %s408, 2
        %s412 = sadd.s32 %s410, %s411
        %s413 = smul.addr %s412, 4
        %s414 = scalar_lea.vmem %s5, %s413
        %s415 = ssub.s32 %s24, %s23
        %s416 = sadd.s32 %s415, 1
      $region40: #{disentangled_transformer_block.6} parent=15 // pred_fallthru
        _
      // Predicated region
      $region41: #{disentangled_transformer_block.6} parent=15 // pred_check
        %p417 = pneg %p246
      $region42: #{disentangled_transformer_block.6} parent=15 // pred_check_branch
        %419 = sbr.rel (%p417) target = $region44
      $region43: #{disentangled_transformer_block.6} parent=15 // pred_region
        %s420 = ssub.s32 %s24, %s23
        %p421 = scmp.lt.s32.totalorder %s22, 3
        %s422 = scalar_select %p421, %s22, 3
        %p423 = scmp.lt.s32.totalorder %s420, 1
        %s424 = scalar_select %p423, %s420, 1
        %s425 = smul.addr %s422, 2
        %s426 = sadd.s32 %s424, %s425
        %s427 = smul.addr %s426, 4
        %s428 = scalar_lea.vmem %s6, %s427
        %s429 = ssub.s32 %s24, %s23
      $region44: #{disentangled_transformer_block.6} parent=15 // pred_fallthru
        _
      // Predicated region
      $region45: #{disentangled_transformer_block.6} parent=15 // pred_check
        %p430 = pneg %p278
      $region46: #{disentangled_transformer_block.6} parent=15 // pred_check_branch
        %432 = sbr.rel (%p430) target = $region48
      $region47: #{disentangled_transformer_block.6} parent=15 // pred_region
        %s433 = ssub.s32 %s24, %s23
        %s434 = sadd.s32 %s433, 1
        %p435 = scmp.lt.s32.totalorder %s22, 3
        %s436 = scalar_select %p435, %s22, 3
        %p437 = scmp.lt.s32.totalorder %s434, 1
        %s438 = scalar_select %p437, %s434, 1
        %s439 = smul.addr %s436, 2
        %s440 = sadd.s32 %s438, %s439
        %s441 = smul.addr %s440, 4
        %s442 = scalar_lea.vmem %s7, %s441
        %s443 = ssub.s32 %s24, %s23
        %s444 = sadd.s32 %s443, 1
      $region48: #{disentangled_transformer_block.6} parent=15 // pred_fallthru
        _
    $region16: #{disentangled_transformer_block.6} parent=5 // pred_fallthru
      _
    %p445 = scmp.le.s32.totalorder 1, %s14
    %p446 = scmp.lt.s32.totalorder %s14, 9
    %p447 = pnand %p445, %p446
    %p448 = pneg %p447
    // Predicated region
    $region49: #{disentangled_transformer_block.6} parent=5 // pred_check
      _
    $region50: #{disentangled_transformer_block.6} parent=5 // pred_check_branch
      %450 = sbr.rel (%p447) target = $region52
    $region51: #{disentangled_transformer_block.6} parent=5 // pred_region
      %s451 = ssub.s32 %s14, 1
      %p452 = scmp.lt.s32.totalorder %s25, 1
      %s453 = scalar_select %p452, %s25, 1
      %p454 = scmp.lt.s32.totalorder %s26, 3
      %s455 = scalar_select %p454, %s26, 3
      %p456 = scmp.lt.s32.totalorder %s27, 0
      %s457 = scalar_select %p456, %s27, 0
      %s458 = sadd.s32 %s457, %s455
      %s459 = smul.addr %s453, 4
      %s460 = sadd.s32 %s458, %s459
      %s461 = smul.addr %s460, 4
      %s462 = scalar_lea.vmem %s0, %s461
      %p463 = pneg %p70
      %p464 = pneg %p67
      %p465 = scmp.lt.s32.totalorder %s25, 1
      %s466 = scalar_select %p465, %s25, 1
      %p467 = scmp.lt.s32.totalorder %s26, 3
      %s468 = scalar_select %p467, %s26, 3
      %p469 = scmp.lt.s32.totalorder %s27, 0
      %s470 = scalar_select %p469, %s27, 0
      %s471 = sadd.s32 %s470, %s468
      %s472 = smul.addr %s466, 4
      %s473 = sadd.s32 %s471, %s472
      %s474 = smul.addr %s473, 4
      %s475 = scalar_lea.vmem %s1, %s474
      %p476 = pneg %p100
      %p477 = pneg %p97
      %p478 = scmp.lt.s32.totalorder %s25, 1
      %s479 = scalar_select %p478, %s25, 1
      %p480 = scmp.lt.s32.totalorder %s26, 3
      %s481 = scalar_select %p480, %s26, 3
      %p482 = scmp.lt.s32.totalorder %s28, 0
      %s483 = scalar_select %p482, %s28, 0
      %s484 = sadd.s32 %s483, %s481
      %s485 = smul.addr %s479, 4
      %s486 = sadd.s32 %s484, %s485
      %s487 = smul.addr %s486, 4
      %s488 = scalar_lea.vmem %s2, %s487
      %p489 = pneg %p130
      %p490 = pneg %p127
      %p491 = scmp.lt.s32.totalorder %s25, 1
      %s492 = scalar_select %p491, %s25, 1
      %p493 = scmp.lt.s32.totalorder %s26, 3
      %s494 = scalar_select %p493, %s26, 3
      %p495 = scmp.lt.s32.totalorder %s28, 0
      %s496 = scalar_select %p495, %s28, 0
      %s497 = sadd.s32 %s496, %s494
      %s498 = smul.addr %s492, 4
      %s499 = sadd.s32 %s497, %s498
      %s500 = smul.addr %s499, 4
      %s501 = scalar_lea.vmem %s3, %s500
      %p502 = pneg %p160
      %p503 = pneg %p157
      %s504 = ssub.s32 %s28, %s27
      %p505 = scmp.lt.s32.totalorder %s26, 3
      %s506 = scalar_select %p505, %s26, 3
      %p507 = scmp.lt.s32.totalorder %s504, 1
      %s508 = scalar_select %p507, %s504, 1
      %s509 = smul.addr %s506, 2
      %s510 = sadd.s32 %s508, %s509
      %s511 = smul.addr %s510, 4
      %s512 = scalar_lea.vmem %s4, %s511
      %p513 = pneg %p190
      %p514 = pneg %p187
      %s515 = ssub.s32 %s28, %s27
      %s516 = sadd.s32 %s515, 1
      %p517 = scmp.lt.s32.totalorder %s26, 3
      %s518 = scalar_select %p517, %s26, 3
      %p519 = scmp.lt.s32.totalorder %s516, 1
      %s520 = scalar_select %p519, %s516, 1
      %s521 = smul.addr %s518, 2
      %s522 = sadd.s32 %s520, %s521
      %s523 = smul.addr %s522, 4
      %s524 = scalar_lea.vmem %s5, %s523
      %p525 = pneg %p222
      %p526 = pneg %p219
      %s527 = ssub.s32 %s28, %s27
      %p528 = scmp.lt.s32.totalorder %s26, 3
      %s529 = scalar_select %p528, %s26, 3
      %p530 = scmp.lt.s32.totalorder %s527, 1
      %s531 = scalar_select %p530, %s527, 1
      %s532 = smul.addr %s529, 2
      %s533 = sadd.s32 %s531, %s532
      %s534 = smul.addr %s533, 4
      %s535 = scalar_lea.vmem %s6, %s534
      %p536 = pneg %p252
      %p537 = pneg %p249
      %s538 = ssub.s32 %s28, %s27
      %s539 = sadd.s32 %s538, 1
      %p540 = scmp.lt.s32.totalorder %s26, 3
      %s541 = scalar_select %p540, %s26, 3
      %p542 = scmp.lt.s32.totalorder %s539, 1
      %s543 = scalar_select %p542, %s539, 1
      %s544 = smul.addr %s541, 2
      %s545 = sadd.s32 %s543, %s544
      %s546 = smul.addr %s545, 4
      %s547 = scalar_lea.vmem %s7, %s546
      %p548 = pneg %p284
      %p549 = pneg %p281
      %p550 = pneg %p314
      %p551 = pneg %p311
      %p552 = scmp.lt.s32.totalorder %s25, 1
      %s553 = scalar_select %p552, %s25, 1
      %p554 = scmp.lt.s32.totalorder %s26, 3
      %s555 = scalar_select %p554, %s26, 3
      %p556 = scmp.lt.s32.totalorder %s27, 0
      %s557 = scalar_select %p556, %s27, 0
      %s558 = sadd.s32 %s557, %s555
      %s559 = smul.addr %s553, 4
      %s560 = sadd.s32 %s558, %s559
      %s561 = smul.addr %s560, 4
      %s562 = scalar_lea.vmem %s8, %s561
      %p563 = scmp.lt.s32.totalorder %s25, 1
      %s564 = scalar_select %p563, %s25, 1
      %p565 = scmp.lt.s32.totalorder %s26, 3
      %s566 = scalar_select %p565, %s26, 3
      %p567 = scmp.lt.s32.totalorder %s27, 0
      %s568 = scalar_select %p567, %s27, 0
      %s569 = sadd.s32 %s568, %s566
      %s570 = smul.addr %s564, 4
      %s571 = sadd.s32 %s569, %s570
      %s572 = smul.addr %s571, 4
      %s573 = scalar_lea.vmem %s0, %s572
      %p574 = scmp.lt.s32.totalorder %s25, 1
      %s575 = scalar_select %p574, %s25, 1
      %p576 = scmp.lt.s32.totalorder %s26, 3
      %s577 = scalar_select %p576, %s26, 3
      %p578 = scmp.lt.s32.totalorder %s27, 0
      %s579 = scalar_select %p578, %s27, 0
      %s580 = sadd.s32 %s579, %s577
      %s581 = smul.addr %s575, 4
      %s582 = sadd.s32 %s580, %s581
      %s583 = smul.addr %s582, 4
      %s584 = scalar_lea.vmem %s1, %s583
      %p585 = scmp.lt.s32.totalorder %s25, 1
      %s586 = scalar_select %p585, %s25, 1
      %p587 = scmp.lt.s32.totalorder %s26, 3
      %s588 = scalar_select %p587, %s26, 3
      %p589 = scmp.lt.s32.totalorder %s28, 0
      %s590 = scalar_select %p589, %s28, 0
      %s591 = sadd.s32 %s590, %s588
      %s592 = smul.addr %s586, 4
      %s593 = sadd.s32 %s591, %s592
      %s594 = smul.addr %s593, 4
      %s595 = scalar_lea.vmem %s2, %s594
      %p596 = scmp.lt.s32.totalorder %s25, 1
      %s597 = scalar_select %p596, %s25, 1
      %p598 = scmp.lt.s32.totalorder %s26, 3
      %s599 = scalar_select %p598, %s26, 3
      %p600 = scmp.lt.s32.totalorder %s28, 0
      %s601 = scalar_select %p600, %s28, 0
      %s602 = sadd.s32 %s601, %s599
      %s603 = smul.addr %s597, 4
      %s604 = sadd.s32 %s602, %s603
      %s605 = smul.addr %s604, 4
      %s606 = scalar_lea.vmem %s3, %s605
      %s607 = ssub.s32 %s28, %s27
      %p608 = scmp.lt.s32.totalorder %s26, 3
      %s609 = scalar_select %p608, %s26, 3
      %p610 = scmp.lt.s32.totalorder %s607, 1
      %s611 = scalar_select %p610, %s607, 1
      %s612 = smul.addr %s609, 2
      %s613 = sadd.s32 %s611, %s612
      %s614 = smul.addr %s613, 4
      %s615 = scalar_lea.vmem %s4, %s614
      %s616 = ssub.s32 %s28, %s27
      %s617 = ssub.s32 %s28, %s27
      %s618 = sadd.s32 %s617, 1
      %p619 = scmp.lt.s32.totalorder %s26, 3
      %s620 = scalar_select %p619, %s26, 3
      %p621 = scmp.lt.s32.totalorder %s618, 1
      %s622 = scalar_select %p621, %s618, 1
      %s623 = smul.addr %s620, 2
      %s624 = sadd.s32 %s622, %s623
      %s625 = smul.addr %s624, 4
      %s626 = scalar_lea.vmem %s5, %s625
      %s627 = ssub.s32 %s28, %s27
      %s628 = sadd.s32 %s627, 1
      %s629 = ssub.s32 %s28, %s27
      %p630 = scmp.lt.s32.totalorder %s26, 3
      %s631 = scalar_select %p630, %s26, 3
      %p632 = scmp.lt.s32.totalorder %s629, 1
      %s633 = scalar_select %p632, %s629, 1
      %s634 = smul.addr %s631, 2
      %s635 = sadd.s32 %s633, %s634
      %s636 = smul.addr %s635, 4
      %s637 = scalar_lea.vmem %s6, %s636
      %s638 = ssub.s32 %s28, %s27
      %s639 = ssub.s32 %s28, %s27
      %s640 = sadd.s32 %s639, 1
      %p641 = scmp.lt.s32.totalorder %s26, 3
      %s642 = scalar_select %p641, %s26, 3
      %p643 = scmp.lt.s32.totalorder %s640, 1
      %s644 = scalar_select %p643, %s640, 1
      %s645 = smul.addr %s642, 2
      %s646 = sadd.s32 %s644, %s645
      %s647 = smul.addr %s646, 4
      %s648 = scalar_lea.vmem %s7, %s647
      %s649 = ssub.s32 %s28, %s27
      %s650 = sadd.s32 %s649, 1
      %p651 = scmp.lt.s32.totalorder %s25, 1
      %s652 = scalar_select %p651, %s25, 1
      %p653 = scmp.lt.s32.totalorder %s26, 3
      %s654 = scalar_select %p653, %s26, 3
      %p655 = scmp.lt.s32.totalorder %s27, 0
      %s656 = scalar_select %p655, %s27, 0
      %s657 = sadd.s32 %s656, %s654
      %s658 = smul.addr %s652, 4
      %s659 = sadd.s32 %s657, %s658
      %s660 = smul.addr %s659, 4
      %s661 = scalar_lea.vmem %s8, %s660
      %p663 = scmp.eq.s32.totalorder %s28, 0
      // Predicated region
      $region53: #{disentangled_transformer_block.6} parent=51 // pred_check
        %p664 = pneg %p663
      $region54: #{disentangled_transformer_block.6} parent=51 // pred_check_branch
        %666 = sbr.rel (%p664) target = $region56
      $region55: #{disentangled_transformer_block.6} parent=51 // pred_region
        %vm667 = vcmask 7168
        %668 = vst.msk [vmem:[#allocation2] sm:$0xff] %vm667, -inf
        %669 = vst.msk [vmem:[#allocation3] sm:$0xff] %vm667, 0.0
        %vm670 = vcmask 64512
        %671 = vst.msk [vmem:[#allocation4] sm:$0xff] %vm670, 0.0
      $region56: #{disentangled_transformer_block.6} parent=51 // pred_fallthru
        _
      %v672 = vld [vmem:[%s573] sm:$0xf]
      %v673 = vld [vmem:[%s584] sm:$0xf]
      %v674 = vld [vmem:[%s595] sm:$0xf]
      %v675 = vld [vmem:[%s606] sm:$0xf]
      %v676 = vld [vmem:[%s615] sm:$0xf]
      %v677 = vld [vmem:[%s626] sm:$0xf]
      %v679 = vunpack.c.l.b16 %v676
      %v680 = vpack.c.b16 %v679, %v679
      %vm681 = vcmask 1043456
      %v684 = vsel %vm681, %v674, %v680
      %vm685 = vcmask 64512
      %v687 = vsel %vm685, %v672, 0
      %v689 = vsel %vm685, %v684, 0
      %v692 = vsel %vm685, %v677, 0
      %694 = vmatpush.bf16.xpose.msra.mxu0 0
      %695 = vmatpush.bf16.xpose.msra.mxu0 0
      %696 = vmatpush.bf16.xpose.msra.mxu0 0
      %697 = vmatpush.bf16.xpose.msra.mxu0 0
      %698 = vmatpush.bf16.xpose.msra.mxu0 0
      %699 = vmatpush.bf16.xpose.msra.mxu0 0
      %700 = vmatpush.bf16.xpose.msra.mxu0 %v692
      %701 = vmatpush.bf16.xpose.msra.mxu0 %v689
      %702 = vmatmul.bf16.gmra.mxu0 %v687
      %v703 = vpop.f32.mrf.mxu0
      %v704 = vadd.f32 0.0, %v703
      %v705 = vpop.f32.mrf.mxu0
      %706 = vdwg.mxu0
      %v707 = vld [vmem:[%s637] sm:$0xf]
      %v708 = vld [vmem:[%s648] sm:$0xf]
      %v710 = vunpack.c.l.b16 %v708
      %v711 = vpack.c.b16 %v710, %v710
      %v714 = vsel %vm681, %v707, %v711
      %v716 = vsel %vm685, %v673, 0
      %v718 = vsel %vm685, %v714, 0
      %720 = vmatpush.bf16.xpose.msra.mxu0 0
      %721 = vmatpush.bf16.xpose.msra.mxu0 0
      %722 = vmatpush.bf16.xpose.msra.mxu0 0
      %723 = vmatpush.bf16.xpose.msra.mxu0 0
      %724 = vmatpush.bf16.xpose.msra.mxu0 0
      %725 = vmatpush.bf16.xpose.msra.mxu0 0
      %726 = vmatpush.bf16.xpose.msra.mxu0 0
      %727 = vmatpush.bf16.xpose.msra.mxu0 %v718
      %728 = vmatmul.bf16.gmra.mxu0 %v716
      %v729 = vpop.f32.mrf.mxu0
      %v730 = vadd.f32 0.0, %v729
      %v731 = vpop.f32.mrf.mxu0
      %732 = vdwg.mxu0
      %734 = vrot.lane.b32.xlu0 %v730, 8
      %v735 = vpop.permute.xlu0 %734
      %v737 = vadd.f32 %v704, %v735
      %v738 = vlaneseq
      %v739 = vand.u32 %v738, 127
      %v740 = vlaneseq
      %v741 = vshrl.u32 %v740, 7
      %v742 = vsub.s32 %v739, %v741
      %v743 = vadd.s32 %v742, 8
      %v744 = vperm.slane %v743, 0
      %v745 = vlaneseq
      %v746 = vshrl.u32 %v745, 7
      %748 = vset.pattern.permute.xlu0 %v746
      %749 = vperm.xlu0 %748, %v744
      %v750 = vpop.permute.xlu0 %749
      %v751 = vperm.slane %v743, 1
      %v752 = vlaneseq
      %v753 = vshrl.u32 %v752, 7
      %755 = vset.pattern.permute.xlu0 %v753
      %756 = vperm.xlu0 %755, %v751
      %v757 = vpop.permute.xlu0 %756
      %v758 = vperm.slane %v743, 2
      %v759 = vlaneseq
      %v760 = vshrl.u32 %v759, 7
      %762 = vset.pattern.permute.xlu0 %v760
      %763 = vperm.xlu0 %762, %v758
      %v764 = vpop.permute.xlu0 %763
      %v765 = vperm.slane %v743, 3
      %v766 = vlaneseq
      %v767 = vshrl.u32 %v766, 7
      %769 = vset.pattern.permute.xlu0 %v767
      %770 = vperm.xlu0 %769, %v765
      %v771 = vpop.permute.xlu0 %770
      %v772 = vperm.slane %v743, 4
      %v773 = vlaneseq
      %v774 = vshrl.u32 %v773, 7
      %776 = vset.pattern.permute.xlu0 %v774
      %777 = vperm.xlu0 %776, %v772
      %v778 = vpop.permute.xlu0 %777
      %v779 = vperm.slane %v743, 5
      %v780 = vlaneseq
      %v781 = vshrl.u32 %v780, 7
      %783 = vset.pattern.permute.xlu0 %v781
      %784 = vperm.xlu0 %783, %v779
      %v785 = vpop.permute.xlu0 %784
      %v786 = vperm.slane %v743, 6
      %v787 = vlaneseq
      %v788 = vshrl.u32 %v787, 7
      %790 = vset.pattern.permute.xlu0 %v788
      %791 = vperm.xlu0 %790, %v786
      %v792 = vpop.permute.xlu0 %791
      %v793 = vperm.slane %v743, 7
      %v794 = vlaneseq
      %v795 = vshrl.u32 %v794, 7
      %797 = vset.pattern.permute.xlu0 %v795
      %798 = vperm.xlu0 %797, %v793
      %v799 = vpop.permute.xlu0 %798
      %vm800 = vcmp.eq.s32.totalorder %v739, %v750
      %vm801 = vcmp.eq.s32.totalorder %v739, %v757
      %vm802 = vcmp.eq.s32.totalorder %v739, %v764
      %vm803 = vcmp.eq.s32.totalorder %v739, %v771
      %vm804 = vcmp.eq.s32.totalorder %v739, %v778
      %vm805 = vcmp.eq.s32.totalorder %v739, %v785
      %vm806 = vcmp.eq.s32.totalorder %v739, %v792
      %vm807 = vcmp.eq.s32.totalorder %v739, %v799
      %v809 = vrot.slane %v737, 1
      %v810 = vrot.slane %v737, 2
      %v811 = vrot.slane %v737, 3
      %v812 = vrot.slane %v737, 4
      %v813 = vrot.slane %v737, 5
      %v814 = vrot.slane %v737, 6
      %v815 = vrot.slane %v737, 7
      %v816 = vperm.slane %v737, 0
      %v817 = vperm.slane %v809, 0
      %v818 = vperm.slane %v810, 0
      %v819 = vperm.slane %v811, 0
      %v820 = vperm.slane %v812, 0
      %v821 = vperm.slane %v813, 0
      %v822 = vperm.slane %v814, 0
      %v823 = vperm.slane %v815, 0
      %824 = vrot.lane.b32.xlu0 %v816, 120
      %v825 = vpop.permute.xlu0 %824
      %826 = vrot.lane.b32.xlu0 %v817, 120
      %v827 = vpop.permute.xlu0 %826
      %828 = vrot.lane.b32.xlu0 %v818, 120
      %v829 = vpop.permute.xlu0 %828
      %830 = vrot.lane.b32.xlu0 %v819, 120
      %v831 = vpop.permute.xlu0 %830
      %832 = vrot.lane.b32.xlu0 %v820, 120
      %v833 = vpop.permute.xlu0 %832
      %834 = vrot.lane.b32.xlu0 %v821, 120
      %v835 = vpop.permute.xlu0 %834
      %836 = vrot.lane.b32.xlu0 %v822, 120
      %v837 = vpop.permute.xlu0 %836
      %838 = vrot.lane.b32.xlu0 %v823, 120
      %v839 = vpop.permute.xlu0 %838
      %v848 = vsel %vm800, %v825, 0.0
      %v849 = vsel %vm801, %v827, 0.0
      %v850 = vsel %vm802, %v829, 0.0
      %v851 = vsel %vm803, %v831, 0.0
      %v852 = vsel %vm804, %v833, 0.0
      %v853 = vsel %vm805, %v835, 0.0
      %v854 = vsel %vm806, %v837, 0.0
      %v855 = vsel %vm807, %v839, 0.0
      %vm856 = vcmask 130048
      %v857 = vsel %vm856, %v848, 0.0
      %858 = vadd.xlane.f32.xlu0 %v857
      %v859 = vpop.xlane.xlu0 %858
      %v860 = vsel %vm856, %v849, 0.0
      %861 = vadd.xlane.f32.xlu0 %v860
      %v862 = vpop.xlane.xlu0 %861
      %v863 = vsel %vm856, %v850, 0.0
      %864 = vadd.xlane.f32.xlu0 %v863
      %v865 = vpop.xlane.xlu0 %864
      %v866 = vsel %vm856, %v851, 0.0
      %867 = vadd.xlane.f32.xlu0 %v866
      %v868 = vpop.xlane.xlu0 %867
      %v869 = vsel %vm856, %v852, 0.0
      %870 = vadd.xlane.f32.xlu0 %v869
      %v871 = vpop.xlane.xlu0 %870
      %v872 = vsel %vm856, %v853, 0.0
      %873 = vadd.xlane.f32.xlu0 %v872
      %v874 = vpop.xlane.xlu0 %873
      %v875 = vsel %vm856, %v854, 0.0
      %876 = vadd.xlane.f32.xlu0 %v875
      %v877 = vpop.xlane.xlu0 %876
      %v878 = vsel %vm856, %v855, 0.0
      %879 = vadd.xlane.f32.xlu0 %v878
      %v880 = vpop.xlane.xlu0 %879
      %v889 = vperm.slane %v859, %v739
      %v890 = vperm.slane %v862, %v739
      %v891 = vperm.slane %v865, %v739
      %v892 = vperm.slane %v868, %v739
      %v893 = vperm.slane %v871, %v739
      %v894 = vperm.slane %v874, %v739
      %v895 = vperm.slane %v877, %v739
      %v896 = vperm.slane %v880, %v739
      %vm897 = vcmask 1041409
      %v898 = vsel %vm897, %v890, %v889
      %vm899 = vcmask 1042434
      %v900 = vsel %vm899, %v891, %v898
      %vm901 = vcmask 1043459
      %v902 = vsel %vm901, %v892, %v900
      %vm903 = vcmask 1044484
      %v904 = vsel %vm903, %v893, %v902
      %vm905 = vcmask 1045509
      %v906 = vsel %vm905, %v894, %v904
      %vm907 = vcmask 1046534
      %v908 = vsel %vm907, %v895, %v906
      %vm909 = vcmask 1047559
      %v910 = vsel %vm909, %v896, %v908
      %v912 = vadd.f32 %v704, %v910
      %v913 = vld [vmem:[#allocation2] sm:$0xff]
      %v914 = vsel %vm685, %v912, -inf
      %915 = vmax.xlane.f32.xlu0 %v914
      %v916 = vpop.xlane.xlu0 %915
      %v917 = vmax.f32 %v913, %v916
      %v918 = vsub.f32 %v913, %v917
      %v919 = vmul.f32 %v918, 1.442695
      %v920 = vpow.pop %v919
      %922 = vset.pattern.permute.xlu0 0
      %923 = vperm.xlu0 %922, %v917
      %v924 = vpop.permute.xlu0 %923
      %v926 = vsub.f32 %v912, %v924
      %v927 = vmul.f32 %v926, 1.442695
      %v928 = vpow.pop %v927
      %v929 = vld [vmem:[#allocation3] sm:$0xff]
      %v930 = vmul.f32 %v920, %v929
      %v931 = vsel %vm685, %v928, 0.0
      %932 = vadd.xlane.f32.xlu0 %v931
      %v933 = vpop.xlane.xlu0 %932
      %v934 = vadd.f32 %v930, %v933
      %vm935 = vcmask 7168
      %936 = vst.msk [vmem:[#allocation3] sm:$0xff] %vm935, %v934
      %v937 = vld [vmem:[#allocation4] sm:$0xff]
      %939 = vset.pattern.permute.xlu0 0
      %940 = vperm.xlu0 %939, %v920
      %v941 = vpop.permute.xlu0 %940
      %v943 = vmul.f32 %v941, %v937
      %v944 = vpack.c.bf16 %v928, %v928
      %v946 = vsel %vm685, %v944, 0
      %v949 = vsel %vm681, %v675, 0
      %951 = vmatpush.bf16.msra.mxu0 0
      %952 = vmatpush.bf16.msra.mxu0 0
      %953 = vmatpush.bf16.msra.mxu0 0
      %954 = vmatpush.bf16.msra.mxu0 0
      %955 = vmatpush.bf16.msra.mxu0 0
      %956 = vmatpush.bf16.msra.mxu0 0
      %957 = vmatpush.bf16.msra.mxu0 0
      %958 = vmatpush.bf16.msra.mxu0 %v949
      %959 = vmatmul.bf16.gmra.mxu0 %v946
      %v960 = vpop.f32.mrf.mxu0
      %v961 = vadd.f32 0.0, %v960
      %v962 = vpop.f32.mrf.mxu0
      %963 = vdwg.mxu0
      %v964 = vadd.f32 %v943, %v961
      %965 = vst.msk [vmem:[#allocation4] sm:$0xff] %vm685, %v964
      %966 = vst.msk [vmem:[#allocation2] sm:$0xff] %vm935, %v917
      // Predicated region
      $region57: #{disentangled_transformer_block.6} parent=51 // pred_check
        %p967 = pneg %p663
      $region58: #{disentangled_transformer_block.6} parent=51 // pred_check_branch
        %969 = sbr.rel (%p967) target = $region60
      $region59: #{disentangled_transformer_block.6} parent=51 // pred_region
        %v970 = vld [vmem:[#allocation4] sm:$0xff]
        %v971 = vld [vmem:[#allocation3] sm:$0xff]
        %973 = vset.pattern.permute.xlu0 0
        %974 = vperm.xlu0 %973, %v971
        %v975 = vpop.permute.xlu0 %974
        %v977 = vrcp.pop %v975
        %v978 = vmul.f32 %v975, %v977
        %v979 = vsub.f32 1.0, %v978
        %v980 = vmul.f32 %v977, %v979
        %v981 = vadd.f32 %v977, %v980
        %vm982 = vweird.f32 %v975
        %vm983 = vweird.f32 %v977
        %vm984 = vmor %vm982, %vm983
        %v985 = vsel %vm984, %v977, %v981
        %v986 = vand.u32 2147483647, %v975
        %vm987 = vcmp.eq.f32.partialorder %v986, 8.507059e+37
        %v988 = vand.u32 %v975, 2147483648
        %v989 = vor.u32 1.1754944e-38, %v988
        %v990 = vsel %vm987, %v989, %v985
        %v991 = vmul.f32 %v970, %v990
        %v992 = vpack.c.bf16 %v991, %v991
        %vm993 = vcmask 60416
        %994 = vst.msk [vmem:[%s661] sm:$0xf] %vm993, %v992
      $region60: #{disentangled_transformer_block.6} parent=51 // pred_fallthru
        _
      %p995 = scmp.lt.s32.totalorder %s25, 1
      %s996 = scalar_select %p995, %s25, 1
      %p997 = scmp.lt.s32.totalorder %s26, 3
      %s998 = scalar_select %p997, %s26, 3
      %p999 = scmp.lt.s32.totalorder %s27, 0
      %s1000 = scalar_select %p999, %s27, 0
      %s1001 = sadd.s32 %s1000, %s998
      %s1002 = smul.addr %s996, 4
      %s1003 = sadd.s32 %s1001, %s1002
      %s1004 = smul.addr %s1003, 4
      %s1005 = scalar_lea.vmem %s8, %s1004
      // Predicated region
      $region61: #{disentangled_transformer_block.6} parent=51 // pred_check
        %p1006 = pneg %p311
      $region62: #{disentangled_transformer_block.6} parent=51 // pred_check_branch
        %1008 = sbr.rel (%p1006) target = $region64
      $region63: #{disentangled_transformer_block.6} parent=51 // pred_region
        _
      $region64: #{disentangled_transformer_block.6} parent=51 // pred_fallthru
        _
    $region52: #{disentangled_transformer_block.6} parent=5 // pred_fallthru
      _
    %p1009 = scmp.le.s32.totalorder 2, %s14
    // Predicated region
    $region65: #{disentangled_transformer_block.6} parent=5 // pred_check
      %p1010 = pneg %p1009
    $region66: #{disentangled_transformer_block.6} parent=5 // pred_check_branch
      %1012 = sbr.rel (%p1010) target = $region68
    $region67: #{disentangled_transformer_block.6} parent=5 // pred_region
      %s1013 = ssub.s32 %s14, 2
      // Predicated region
      $region69: #{disentangled_transformer_block.6} parent=67 // pred_check
        %p1014 = pneg %p317
      $region70: #{disentangled_transformer_block.6} parent=67 // pred_check_branch
        %1016 = sbr.rel (%p1014) target = $region72
      $region71: #{disentangled_transformer_block.6} parent=67 // pred_region
        %p1017 = scmp.lt.s32.totalorder %s29, 1
        %s1018 = scalar_select %p1017, %s29, 1
        %p1019 = scmp.lt.s32.totalorder %s30, 3
        %s1020 = scalar_select %p1019, %s30, 3
        %p1021 = scmp.lt.s32.totalorder %s31, 0
        %s1022 = scalar_select %p1021, %s31, 0
        %s1023 = sadd.s32 %s1022, %s1020
        %s1024 = smul.addr %s1018, 4
        %s1025 = sadd.s32 %s1023, %s1024
        %s1026 = smul.addr %s1025, 4
        %s1027 = scalar_lea.vmem %s8, %s1026
      $region72: #{disentangled_transformer_block.6} parent=67 // pred_fallthru
        _
    $region68: #{disentangled_transformer_block.6} parent=5 // pred_fallthru
      _
  $region6: #{disentangled_transformer_block.6} parent=0 // loop_footer
    %s18 = sadd.s32 1, %s14
  $region7: #{disentangled_transformer_block.6} parent=0 // loop_footer_branch
    %13 = sbr.rel target = $region3
  $region8: #{disentangled_transformer_block.6} parent=0 // loop_exit
    _

</llo_original>
